<compile_context>
chip_gen: v7x
topology: tpu7x:2x2x1
jax: 0.10.0
libtpu: 0.0.40
codegen_flags: <defaults>
</compile_context>

<pallas_src>
import jax
import jax.numpy as jnp
from jax.experimental import pallas as pl
from jax.experimental.pallas import tpu as pltpu


def attention_l_kernel(q_ref, v_ref, w0q_ref, w0v_ref, b0_ref, w1_ref, b1_ref, o_ref):
    # Per-grid-step (one batch tile) shapes:
    #   q_ref  : (Bt, D)       v_ref : (Bt, R, D)
    #   w0q_ref: (D, H)        w0v_ref: (D, H)      b0_ref: (1, H)
    #   w1_ref : (H, G)        b1_ref : (1, G)
    #   o_ref  : (Bt, G*D)
    Bt, R, D = v_ref.shape
    H = w0q_ref.shape[1]
    G = w1_ref.shape[1]

    q = q_ref[...]                                                   # (Bt, D)
    v = v_ref[...]                                                   # (Bt, R, D)

    # linear0 on the (implicit) concat [q_expanded, v] along features, + ReLU.
    # q only contributes once per batch element, so project it at M = Bt.
    hq = jnp.dot(q, w0q_ref[...], preferred_element_type=jnp.float32)          # (Bt, H)
    hv = jnp.dot(v.reshape(Bt * R, D), w0v_ref[...],
                 preferred_element_type=jnp.float32)                           # (Bt*R, H)
    h = jnp.maximum(hv.reshape(Bt, R, H) + hq[:, None, :] + b0_ref[...], 0.0)  # (Bt, R, H)

    # linear1 -> glimpse logits
    logits = jnp.dot(h.reshape(Bt * R, H).astype(w1_ref.dtype), w1_ref[...],
                     preferred_element_type=jnp.float32)
    logits = logits.reshape(Bt, R, G) + b1_ref[...]                            # (Bt, R, G)

    # stable softmax over regions (torch dim=1), in f32
    m = jnp.max(logits, axis=1, keepdims=True)
    e = jnp.exp(logits - m)
    alpha = e / jnp.sum(e, axis=1, keepdims=True)                              # (Bt, R, G)

    # per-glimpse weighted sum over regions as one batched MXU contraction:
    #   out[b, g, :] = sum_r alpha[b, r, g] * v[b, r, :]
    out = jnp.einsum('brg,brd->bgd', alpha.astype(v.dtype), v,
                     preferred_element_type=jnp.float32)                       # (Bt, G, D)

    # lane-flattened store; ordering matches torch.cat(v_outs, dim=1)
    for g in range(G):
        o_ref[:, g * D:(g + 1) * D] = out[:, g, :].astype(o_ref.dtype)


def _round_up(x, m):
    return ((x + m - 1) // m) * m


def _pick_batch_tile(B, R, D, H, G, in_itemsize, vmem_budget=12 * 1024 * 1024):
    """Largest batch tile (multiple of 8, capped at 128) that fits a conservative
    VMEM budget (double-buffered q/v/out tiles + resident weights + f32 temps)."""
    per_b = (2 * (D + R * D + G * D) * in_itemsize          # double-buffered tiles
             + (R * H + 2 * R * G + G * D) * 4)             # f32 intermediates
    fixed = 2 * (2 * D * H + H * G) * in_itemsize + (H + G) * 8
    avail = max(vmem_budget - fixed, per_b * 8)
    bt = min(128, avail // per_b)
    bt = max(8, (bt // 8) * 8)
    return int(min(bt, _round_up(B, 8)))


def attention_l(q, v, w0, b0, w1, b1, *, compute_dtype=None):
    """q: (B, D), v: (B, R, D), w0: (2D, H), b0: (H,), w1: (H, G), b1: (G,) -> (B, G*D).

    compute_dtype: optionally cast matmul operands (q, v, W0, W1) to e.g.
    jnp.bfloat16 for v6e/v7x; accumulation, softmax and output stay f32-accurate.
    """
    B, D = q.shape
    _, R, _ = v.shape
    H = w0.shape[1]
    G = w1.shape[1]
    out_dtype = q.dtype

    mm_dtype = jnp.dtype(compute_dtype) if compute_dtype is not None else jnp.dtype(q.dtype)

    Bt = _pick_batch_tile(B, R, D, H, G, mm_dtype.itemsize)
    B_pad = _round_up(B, Bt)

    q_p = q.astype(mm_dtype)
    v_p = v.astype(mm_dtype)
    if B_pad != B:
        q_p = jnp.pad(q_p, ((0, B_pad - B), (0, 0)))
        v_p = jnp.pad(v_p, ((0, B_pad - B), (0, 0), (0, 0)))

    w0q = w0[:D, :].astype(mm_dtype)      # q half of linear0 weight
    w0v = w0[D:, :].astype(mm_dtype)      # v half of linear0 weight
    w1c = w1.astype(mm_dtype)
    b0_2 = b0.reshape(1, H).astype(jnp.float32)
    b1_2 = b1.reshape(1, G).astype(jnp.float32)

    cost = pl.CostEstimate(
        flops=2 * B_pad * R * (2 * D * H + H * G + G * D),
        transcendentals=B_pad * R * G,
        bytes_accessed=int((q_p.size + v_p.size) * mm_dtype.itemsize
                           + (w0.size + w1.size + b0.size + b1.size) * 4
                           + B_pad * G * D * jnp.dtype(out_dtype).itemsize),
    )

    out = pl.pallas_call(
        attention_l_kernel,
        out_shape=jax.ShapeDtypeStruct((B_pad, G * D), out_dtype),
        grid_spec=pltpu.PrefetchScalarGridSpec(
            num_scalar_prefetch=0,
            grid=(B_pad // Bt,),
            in_specs=[
                pl.BlockSpec((Bt, D), lambda b: (b, 0)),        # q tile
                pl.BlockSpec((Bt, R, D), lambda b: (b, 0, 0)),  # v tile
                pl.BlockSpec((D, H), lambda b: (0, 0)),         # W0 (q half)
                pl.BlockSpec((D, H), lambda b: (0, 0)),         # W0 (v half)
                pl.BlockSpec((1, H), lambda b: (0, 0)),         # b0
                pl.BlockSpec((H, G), lambda b: (0, 0)),         # W1
                pl.BlockSpec((1, G), lambda b: (0, 0)),         # b1
            ],
            out_specs=pl.BlockSpec((Bt, G * D), lambda b: (b, 0)),
        ),
        compiler_params=pltpu.CompilerParams(
            dimension_semantics=("parallel",)),
        cost_estimate=cost,
    )(q_p, v_p, w0q, w0v, b0_2, w1c, b1_2)

    # glue: drop batch padding; (B, G*D) already matches torch.cat ordering
    return out[:B]


def attention_l_reference(q, v, w0, b0, w1, b1):
    """Pure-JAX reference matching the PyTorch forward (mlp_glimpses > 0 branch)."""
    B, D = q.shape
    R = v.shape[1]
    qe = jnp.broadcast_to(q[:, None, :], (B, R, D))
    alpha = jnp.concatenate([qe, v], axis=-1)           # fusion = cat(dim=-1)
    alpha = jnp.maximum(alpha @ w0 + b0, 0.0)           # linear0 + relu
    alpha = alpha @ w1 + b1                             # linear1
    alpha = jax.nn.softmax(alpha, axis=1)               # softmax over regions
    G = alpha.shape[2]
    outs = [jnp.sum(alpha[:, :, g:g + 1] * v, axis=1) for g in range(G)]
    return jnp.concatenate(outs, axis=1)


if __name__ == "__main__":
    B, R, D = 2, 8, 32          # batch, regions, feature dim
    H, G = 32, 2                # hidden_units, mlp_glimpses
    input_dim = 2 * D           # concat([q, v]) feature size

    key = jax.random.PRNGKey(0)
    kq, kv, kw0, kb0, kw1, kb1 = jax.random.split(key, 6)
    q = jax.random.normal(kq, (B, D), jnp.float32)
    v = jax.random.normal(kv, (B, R, D), jnp.float32)
    w0 = jax.random.normal(kw0, (input_dim, H), jnp.float32) * 0.1
    b0 = jax.random.normal(kb0, (H,), jnp.float32) * 0.1
    w1 = jax.random.normal(kw1, (H, G), jnp.float32) * 0.1
    b1 = jax.random.normal(kb1, (G,), jnp.float32) * 0.1

    out = attention_l(q, v, w0, b0, w1, b1)
    out = jax.block_until_ready(out)

    ref = attention_l_reference(q, v, w0, b0, w1, b1)
    assert out.shape == (B, G * D), out.shape
    assert jnp.allclose(out, ref, atol=1e-4, rtol=1e-4), (
        float(jnp.max(jnp.abs(out - ref))))

    print("KERNEL_OK")
</pallas_src>

<mosaic_0001>
module attributes {stable_mosaic.version = 11 : i64} {
  func.func @attention_l_kernel(%arg0: i32, %arg1: memref<8x32xf32, #tpu.memory_space<vmem>>, %arg2: memref<8x8x32xf32, #tpu.memory_space<vmem>>, %arg3: memref<32x32xf32, #tpu.memory_space<vmem>>, %arg4: memref<32x32xf32, #tpu.memory_space<vmem>>, %arg5: memref<1x32xf32, #tpu.memory_space<vmem>>, %arg6: memref<32x2xf32, #tpu.memory_space<vmem>>, %arg7: memref<1x2xf32, #tpu.memory_space<vmem>>, %arg8: memref<8x64xf32, #tpu.memory_space<vmem>>) attributes {dimension_semantics = [#tpu.dimension_semantics<parallel>], iteration_bounds = array<i64: 1>, scalar_prefetch = 0 : i64, scratch_operands = 0 : i64, tpu.core_type = #tpu.core_type<tc>, window_params = [{transform_indices = @transform_0, window_bounds = array<i64: 8, 32>}, {transform_indices = @transform_1, window_bounds = array<i64: 8, 8, 32>}, {pipeline_mode = #tpu.pipeline_mode<synchronous>, transform_indices = @transform_2, window_bounds = array<i64: 32, 32>}, {pipeline_mode = #tpu.pipeline_mode<synchronous>, transform_indices = @transform_3, window_bounds = array<i64: 32, 32>}, {pipeline_mode = #tpu.pipeline_mode<synchronous>, transform_indices = @transform_4, window_bounds = array<i64: 1, 32>}, {pipeline_mode = #tpu.pipeline_mode<synchronous>, transform_indices = @transform_5, window_bounds = array<i64: 32, 2>}, {pipeline_mode = #tpu.pipeline_mode<synchronous>, transform_indices = @transform_6, window_bounds = array<i64: 1, 2>}, {transform_indices = @transform_7, window_bounds = array<i64: 8, 64>}]} {
    %c0 = arith.constant 0 : index
    %c0_0 = arith.constant 0 : index
    %0 = vector.load %arg1[%c0, %c0_0] : memref<8x32xf32, #tpu.memory_space<vmem>>, vector<8x32xf32>
    %c0_1 = arith.constant 0 : index
    %c0_2 = arith.constant 0 : index
    %c0_3 = arith.constant 0 : index
    %1 = vector.load %arg2[%c0_1, %c0_2, %c0_3] : memref<8x8x32xf32, #tpu.memory_space<vmem>>, vector<8x8x32xf32>
    %c0_4 = arith.constant 0 : index
    %c0_5 = arith.constant 0 : index
    %2 = vector.load %arg3[%c0_4, %c0_5] : memref<32x32xf32, #tpu.memory_space<vmem>>, vector<32x32xf32>
    %cst = arith.constant dense<0.000000e+00> : vector<8x32xf32>
    %3 = tpu.matmul %0, %2, %cst {dimension_numbers = #tpu.dot_dimension_numbers<[1], [0], [0], [1], [0, 0, 1, 1], [], []>} : vector<8x32xf32>, vector<32x32xf32>, vector<8x32xf32> -> vector<8x32xf32>
    %4 = vector.shape_cast %1 : vector<8x8x32xf32> to vector<64x32xf32>
    %c0_6 = arith.constant 0 : index
    %c0_7 = arith.constant 0 : index
    %5 = vector.load %arg4[%c0_6, %c0_7] : memref<32x32xf32, #tpu.memory_space<vmem>>, vector<32x32xf32>
    %cst_8 = arith.constant dense<0.000000e+00> : vector<64x32xf32>
    %6 = tpu.matmul %4, %5, %cst_8 {dimension_numbers = #tpu.dot_dimension_numbers<[1], [0], [0], [1], [0, 0, 1, 1], [], []>} : vector<64x32xf32>, vector<32x32xf32>, vector<64x32xf32> -> vector<64x32xf32>
    %7 = vector.shape_cast %6 : vector<64x32xf32> to vector<8x8x32xf32>
    %8 = vector.shape_cast %3 : vector<8x32xf32> to vector<8x1x32xf32>
    %9 = vector.broadcast %8 : vector<8x1x32xf32> to vector<8x8x32xf32>
    %10 = arith.addf %7, %9 : vector<8x8x32xf32>
    %c0_9 = arith.constant 0 : index
    %c0_10 = arith.constant 0 : index
    %11 = vector.load %arg5[%c0_9, %c0_10] : memref<1x32xf32, #tpu.memory_space<vmem>>, vector<1x32xf32>
    %12 = vector.shape_cast %11 : vector<1x32xf32> to vector<1x1x32xf32>
    %13 = vector.broadcast %12 : vector<1x1x32xf32> to vector<8x8x32xf32>
    %14 = arith.addf %10, %13 : vector<8x8x32xf32>
    %cst_11 = arith.constant 0.000000e+00 : f32
    %15 = vector.broadcast %cst_11 : f32 to vector<8x8x32xf32>
    %16 = arith.maximumf %14, %15 : vector<8x8x32xf32>
    %17 = vector.shape_cast %16 : vector<8x8x32xf32> to vector<64x32xf32>
    %c0_12 = arith.constant 0 : index
    %c0_13 = arith.constant 0 : index
    %18 = vector.load %arg6[%c0_12, %c0_13] : memref<32x2xf32, #tpu.memory_space<vmem>>, vector<32x2xf32>
    %cst_14 = arith.constant dense<0.000000e+00> : vector<64x2xf32>
    %19 = tpu.matmul %17, %18, %cst_14 {dimension_numbers = #tpu.dot_dimension_numbers<[1], [0], [0], [1], [0, 0, 1, 1], [], []>} : vector<64x32xf32>, vector<32x2xf32>, vector<64x2xf32> -> vector<64x2xf32>
    %20 = vector.shape_cast %19 : vector<64x2xf32> to vector<8x8x2xf32>
    %c0_15 = arith.constant 0 : index
    %c0_16 = arith.constant 0 : index
    %21 = vector.load %arg7[%c0_15, %c0_16] : memref<1x2xf32, #tpu.memory_space<vmem>>, vector<1x2xf32>
    %22 = vector.shape_cast %21 : vector<1x2xf32> to vector<1x1x2xf32>
    %23 = vector.broadcast %22 : vector<1x1x2xf32> to vector<8x8x2xf32>
    %24 = arith.addf %20, %23 : vector<8x8x2xf32>
    %cst_17 = arith.constant dense<0xFF800000> : vector<8x2xf32>
    %25 = vector.multi_reduction <maximumf>, %24, %cst_17 [1] : vector<8x8x2xf32> to vector<8x2xf32>
    %26 = vector.shape_cast %25 : vector<8x2xf32> to vector<8x1x2xf32>
    %27 = vector.broadcast %26 : vector<8x1x2xf32> to vector<8x8x2xf32>
    %28 = arith.subf %24, %27 : vector<8x8x2xf32>
    %29 = math.exp %28 : vector<8x8x2xf32>
    %cst_18 = arith.constant dense<0.000000e+00> : vector<8x2xf32>
    %30 = vector.multi_reduction <add>, %29, %cst_18 [1] : vector<8x8x2xf32> to vector<8x2xf32>
    %31 = vector.shape_cast %30 : vector<8x2xf32> to vector<8x1x2xf32>
    %32 = vector.broadcast %31 : vector<8x1x2xf32> to vector<8x8x2xf32>
    %33 = arith.divf %29, %32 : vector<8x8x2xf32>
    "tpu.trace_start"() <{level = 10 : i32, message = "brg,brd->bgd"}> : () -> ()
    %cst_19 = arith.constant dense<0.000000e+00> : vector<8x2x32xf32>
    %34 = tpu.matmul %33, %1, %cst_19 {dimension_numbers = #tpu.dot_dimension_numbers<[1], [1], [2], [2], [0, 0, 0, 2, 1, 2], [0], [0]>} : vector<8x8x2xf32>, vector<8x8x32xf32>, vector<8x2x32xf32> -> vector<8x2x32xf32>
    "tpu.trace_stop"() : () -> ()
    %35 = vector.extract_strided_slice %34 {offsets = [0, 0, 0], sizes = [8, 1, 32], strides = [1, 1, 1]} : vector<8x2x32xf32> to vector<8x1x32xf32>
    %36 = vector.shape_cast %35 : vector<8x1x32xf32> to vector<8x32xf32>
    %c0_20 = arith.constant 0 : index
    %c0_21 = arith.constant 0 : index
    %37 = vector.load %arg8[%c0_20, %c0_21] : memref<8x64xf32, #tpu.memory_space<vmem>>, vector<8x32xf32>
    tpu.vector_store %arg8[%c0_20, %c0_21], %36 {strides = array<i32>} : memref<8x64xf32, #tpu.memory_space<vmem>>, vector<8x32xf32>,
    %38 = vector.extract_strided_slice %34 {offsets = [0, 1, 0], sizes = [8, 1, 32], strides = [1, 1, 1]} : vector<8x2x32xf32> to vector<8x1x32xf32>
    %39 = vector.shape_cast %38 : vector<8x1x32xf32> to vector<8x32xf32>
    %c0_22 = arith.constant 0 : index
    %c32 = arith.constant 32 : index
    %40 = vector.load %arg8[%c0_22, %c32] : memref<8x64xf32, #tpu.memory_space<vmem>>, vector<8x32xf32>
    tpu.vector_store %arg8[%c0_22, %c32], %39 {strides = array<i32>} : memref<8x64xf32, #tpu.memory_space<vmem>>, vector<8x32xf32>,
    return
  }
  func.func @transform_0(%arg0: i32) -> (i32, i32) {
    %c0_i32 = arith.constant 0 : i32
    %c0_i32_0 = arith.constant 0 : i32
    return %arg0, %c0_i32 : i32, i32
  }
  func.func @transform_1(%arg0: i32) -> (i32, i32, i32) {
    %c0_i32 = arith.constant 0 : i32
    %c0_i32_0 = arith.constant 0 : i32
    %c0_i32_1 = arith.constant 0 : i32
    return %arg0, %c0_i32, %c0_i32_0 : i32, i32, i32
  }
  func.func @transform_2(%arg0: i32) -> (i32, i32) {
    %c0_i32 = arith.constant 0 : i32
    %c0_i32_0 = arith.constant 0 : i32
    %c0_i32_1 = arith.constant 0 : i32
    return %c0_i32, %c0_i32_0 : i32, i32
  }
  func.func @transform_3(%arg0: i32) -> (i32, i32) {
    %c0_i32 = arith.constant 0 : i32
    %c0_i32_0 = arith.constant 0 : i32
    %c0_i32_1 = arith.constant 0 : i32
    return %c0_i32, %c0_i32_0 : i32, i32
  }
  func.func @transform_4(%arg0: i32) -> (i32, i32) {
    %c0_i32 = arith.constant 0 : i32
    %c0_i32_0 = arith.constant 0 : i32
    %c0_i32_1 = arith.constant 0 : i32
    return %c0_i32, %c0_i32_0 : i32, i32
  }
  func.func @transform_5(%arg0: i32) -> (i32, i32) {
    %c0_i32 = arith.constant 0 : i32
    %c0_i32_0 = arith.constant 0 : i32
    %c0_i32_1 = arith.constant 0 : i32
    return %c0_i32, %c0_i32_0 : i32, i32
  }
  func.func @transform_6(%arg0: i32) -> (i32, i32) {
    %c0_i32 = arith.constant 0 : i32
    %c0_i32_0 = arith.constant 0 : i32
    %c0_i32_1 = arith.constant 0 : i32
    return %c0_i32, %c0_i32_0 : i32, i32
  }
  func.func @transform_7(%arg0: i32) -> (i32, i32) {
    %c0_i32 = arith.constant 0 : i32
    %c0_i32_0 = arith.constant 0 : i32
    return %arg0, %c0_i32 : i32, i32
  }
}

</mosaic_0001>

<llo_original>
// kernel: tpu_custom_call.1
$region0: #{tpu_custom_call.1}
  #allocation0 [shape = 'u32[]', space=smem, size = 0x4, offset = 0x4, fixed_abs, tag = 'smem constant byte address 0x4 - core index']
  #allocation1 [shape = 'u32[144,128]{1,0:T(1,128)}', space=vmem, size = 0x12000, scoped, tag = 'internal scratch']
  %s0 = inlined_call_operand.vmem [shape: f32[8,32], index: 0, kind: input, shape index: {}]
  %s1 = inlined_call_operand.hbm [shape: f32[8,8,32], index: 1, kind: input, shape index: {}]
  %s2 = inlined_call_operand.vmem [shape: f32[32,32], index: 2, kind: input, shape index: {}]
  %s3 = inlined_call_operand.hbm [shape: f32[32,32], index: 3, kind: input, shape index: {}]
  %s4 = inlined_call_operand.vmem [shape: f32[1,32], index: 4, kind: input, shape index: {}]
  %s5 = inlined_call_operand.vmem [shape: f32[32,2], index: 5, kind: input, shape index: {}]
  %s6 = inlined_call_operand.vmem [shape: f32[1,2], index: 6, kind: input, shape index: {}]
  %s7 = inlined_call_operand.hbm [shape: f32[8,64], index: 7, kind: output, shape index: {}]
  %s8 = sld [smem:[#allocation0]]
  $region46: #{tpu_custom_call.1} parent=0
    _
  %s10 = ssub.s32 1, %s8
  %s11 = scalar_select 0, %s10, %s8
  $region1: #{tpu_custom_call.1} parent=0
    #allocation2 [shape = 'u8[32768]{0}', space=vmem, size = 0x8000, scoped, tag = 'input window, operand 1, single buffered']
    #allocation3 [shape = 's32[1]{0}', space=sflag, size = 0x4, scoped, tag = 'scoped memory for tpu_custom_call.1']
    #allocation4 [shape = 's32[1]{0}', space=sflag, size = 0x4, scoped, tag = 'scoped memory for tpu_custom_call.1']
    #allocation5 [shape = 'u8[16384]{0}', space=vmem, size = 0x4000, scoped, tag = 'input window, operand 3, single buffered']
    #allocation6 [shape = 's32[1]{0}', space=sflag, size = 0x4, scoped, tag = 'scoped memory for tpu_custom_call.1']
    #allocation7 [shape = 'u8[4096]{0}', space=vmem, size = 0x1000, scoped, tag = 'output window, operand 0, single buffered']
    %12 = vsyncpa [#allocation3], 0
    %13 = vsyncpa [#allocation6], 0
    %14 = vsyncpa [#allocation4], 0
    // Predicated region
    $region2: #{tpu_custom_call.1} parent=1 // pred_check
      _
    $region3: #{tpu_custom_call.1} parent=1 // pred_check_branch
      %16 = sbr.rel (0) target = $region5
    $region4: #{tpu_custom_call.1} parent=1 // pred_region
      _
    $region5: #{tpu_custom_call.1} parent=1 // pred_fallthru
      _
    // Predicated region
    $region6: #{tpu_custom_call.1} parent=1 // pred_check
      _
    $region7: #{tpu_custom_call.1} parent=1 // pred_check_branch
      %18 = sbr.rel (0) target = $region9
    $region8: #{tpu_custom_call.1} parent=1 // pred_region
      %s20 = ssub.s32 1024, 1024
      %21 = vsyncadd [#allocation3], %s20
      %s22 = sshll.u32 [#allocation2], 4
      %s23 = int_to_ptr.vmem [resolvable:$true] %s22
      %28 = dma.hbm_to_vmem [thread:$0]  %s1, 1024, %s23, [#allocation3], 128, 128, 8
    $region9: #{tpu_custom_call.1} parent=1 // pred_fallthru
      _
    // Predicated region
    $region10: #{tpu_custom_call.1} parent=1 // pred_check
      _
    $region11: #{tpu_custom_call.1} parent=1 // pred_check_branch
      %30 = sbr.rel (0) target = $region13
    $region12: #{tpu_custom_call.1} parent=1 // pred_region
      _
    $region13: #{tpu_custom_call.1} parent=1 // pred_fallthru
      _
    // Predicated region
    $region14: #{tpu_custom_call.1} parent=1 // pred_check
      _
    $region15: #{tpu_custom_call.1} parent=1 // pred_check_branch
      %32 = sbr.rel (0) target = $region17
    $region16: #{tpu_custom_call.1} parent=1 // pred_region
      %s34 = ssub.s32 512, 512
      %35 = vsyncadd [#allocation6], %s34
      %s36 = sshll.u32 [#allocation5], 4
      %s37 = int_to_ptr.vmem [resolvable:$true] %s36
      %42 = dma.hbm_to_vmem [thread:$0]  %s3, 512, %s37, [#allocation6], 128, 128, 8
    $region17: #{tpu_custom_call.1} parent=1 // pred_fallthru
      _
    // Predicated region
    $region18: #{tpu_custom_call.1} parent=1 // pred_check
      _
    $region19: #{tpu_custom_call.1} parent=1 // pred_check_branch
      %44 = sbr.rel (0) target = $region21
    $region20: #{tpu_custom_call.1} parent=1 // pred_region
      _
    $region21: #{tpu_custom_call.1} parent=1 // pred_fallthru
      _
    // Predicated region
    $region22: #{tpu_custom_call.1} parent=1 // pred_check
      _
    $region23: #{tpu_custom_call.1} parent=1 // pred_check_branch
      %46 = sbr.rel (0) target = $region25
    $region24: #{tpu_custom_call.1} parent=1 // pred_region
      _
    $region25: #{tpu_custom_call.1} parent=1 // pred_fallthru
      _
    // Predicated region
    $region26: #{tpu_custom_call.1} parent=1 // pred_check
      _
    $region27: #{tpu_custom_call.1} parent=1 // pred_check_branch
      %48 = sbr.rel (0) target = $region29
    $region28: #{tpu_custom_call.1} parent=1 // pred_region
      _
    $region29: #{tpu_custom_call.1} parent=1 // pred_fallthru
      _
    // Predicated region
    $region30: #{tpu_custom_call.1} parent=1 // pred_check
      _
    $region31: #{tpu_custom_call.1} parent=1 // pred_check_branch
      %50 = sbr.rel (0) target = $region33
    $region32: #{tpu_custom_call.1} parent=1 // pred_region
      %51 = dma.done [#allocation3], 1024
    $region33: #{tpu_custom_call.1} parent=1 // pred_fallthru
      _
    // Predicated region
    $region34: #{tpu_custom_call.1} parent=1 // pred_check
      _
    $region35: #{tpu_custom_call.1} parent=1 // pred_check_branch
      %53 = sbr.rel (0) target = $region37
    $region36: #{tpu_custom_call.1} parent=1 // pred_region
      %54 = dma.done [#allocation6], 512
    $region37: #{tpu_custom_call.1} parent=1 // pred_fallthru
      _
    %v55 = vld [vmem:[%s0] sm:$0xff]
    %v56 = vld [vmem:[#allocation2] sm:$0xff]
    %v57 = vld [vmem:[#allocation2 + $0x8] sm:$0xff]
    %v58 = vld [vmem:[#allocation2 + $0x10] sm:$0xff]
    %v59 = vld [vmem:[#allocation2 + $0x18] sm:$0xff]
    %v60 = vld [vmem:[#allocation2 + $0x20] sm:$0xff]
    %v61 = vld [vmem:[#allocation2 + $0x28] sm:$0xff]
    %v62 = vld [vmem:[#allocation2 + $0x30] sm:$0xff]
    %v63 = vld [vmem:[#allocation2 + $0x38] sm:$0xff]
    %v64 = vld [vmem:[%s2] sm:$0xff]
    %v65 = vld [vmem:[%s2 + $0x8] sm:$0xff]
    %v66 = vld [vmem:[%s2 + $0x10] sm:$0xff]
    %v67 = vld [vmem:[%s2 + $0x18] sm:$0xff]
    %vm68 = vcmask 261120
    %v70 = vsel %vm68, %v55, 0
    %72 = vmatprep.subr.mxu0 0.0
    %73 = vmatpush1.msra.mxu0 %v64
    %74 = vmatprep.subr.mxu0 0.0
    %75 = vmatpush1.msra.mxu0 %v65
    %76 = vmatprep.subr.mxu0 0.0
    %77 = vmatpush1.msra.mxu0 %v66
    %78 = vmatprep.subr.mxu0 0.0
    %79 = vmatpush1.msra.mxu0 %v67
    %80 = vmatprep.subr.mxu0 0.0
    %81 = vmatpush1.msra.mxu0 0.0
    %82 = vmatprep.subr.mxu0 0.0
    %83 = vmatpush1.msra.mxu0 0.0
    %84 = vmatprep.subr.mxu0 0.0
    %85 = vmatpush1.msra.mxu0 0.0
    %86 = vmatprep.subr.mxu0 0.0
    %87 = vmatpush1.msra.mxu0 0.0
    %88 = vmatprep.subr.mxu0 0.0
    %89 = vmatpush1.msra.mxu0 0.0
    %90 = vmatprep.subr.mxu0 0.0
    %91 = vmatpush1.msra.mxu0 0.0
    %92 = vmatprep.subr.mxu0 0.0
    %93 = vmatpush1.msra.mxu0 0.0
    %94 = vmatprep.subr.mxu0 0.0
    %95 = vmatpush1.msra.mxu0 0.0
    %96 = vmatprep.subr.mxu0 0.0
    %97 = vmatpush1.msra.mxu0 0.0
    %98 = vmatprep.subr.mxu0 0.0
    %99 = vmatpush1.msra.mxu0 0.0
    %100 = vmatprep.subr.mxu0 0.0
    %101 = vmatpush1.msra.mxu0 0.0
    %102 = vmatprep.subr.mxu0 0.0
    %103 = vmatpush1.msra.mxu0 0.0
    %104 = vmatprep.subr.mxu0 0.0
    %105 = vmatpush1.msra.mxu0 0.0
    %106 = vmatprep.subr.mxu0 0.0
    %107 = vmatpush1.msra.mxu0 0.0
    %108 = vmatprep.subr.mxu0 0.0
    %109 = vmatpush1.msra.mxu0 0.0
    %110 = vmatprep.subr.mxu0 0.0
    %111 = vmatpush1.msra.mxu0 0.0
    %112 = vmatprep.subr.mxu0 0.0
    %113 = vmatpush1.msra.mxu0 0.0
    %114 = vmatprep.subr.mxu0 0.0
    %115 = vmatpush1.msra.mxu0 0.0
    %116 = vmatprep.subr.mxu0 0.0
    %117 = vmatpush1.msra.mxu0 0.0
    %118 = vmatprep.subr.mxu0 0.0
    %119 = vmatpush1.msra.mxu0 0.0
    %120 = vmatprep.subr.mxu0 0.0
    %121 = vmatpush1.msra.mxu0 0.0
    %122 = vmatprep.subr.mxu0 0.0
    %123 = vmatpush1.msra.mxu0 0.0
    %124 = vmatprep.subr.mxu0 0.0
    %125 = vmatpush1.msra.mxu0 0.0
    %126 = vmatprep.subr.mxu0 0.0
    %127 = vmatpush1.msra.mxu0 0.0
    %128 = vmatprep.subr.mxu0 0.0
    %129 = vmatpush1.msra.mxu0 0.0
    %130 = vmatprep.subr.mxu0 0.0
    %131 = vmatpush1.msra.mxu0 0.0
    %132 = vmatprep.subr.mxu0 0.0
    %133 = vmatpush1.msra.mxu0 0.0
    %134 = vmatprep.subr.mxu0 0.0
    %135 = vmatpush1.msra.mxu0 0.0
    %136 = vmatprep.mubr.f32.mxu0 0.0
    %137 = vmatmul.mubr.f32.gmra.mrb[0].mxu0 %v70
    %v138 = vpop.f32.mrb[0].mxu0
    %v139 = vadd.f32 0.0, %v138
    %v140 = vpop.f32.mrb[0].mxu0
    %141 = vdwg.mxu0
    %v142 = vld [vmem:[#allocation5] sm:$0xff]
    %v143 = vld [vmem:[#allocation5 + $0x8] sm:$0xff]
    %v144 = vld [vmem:[#allocation5 + $0x10] sm:$0xff]
    %v145 = vld [vmem:[#allocation5 + $0x18] sm:$0xff]
    %v147 = vsel %vm68, %v56, 0
    %v150 = vsel %vm68, %v57, 0
    %v153 = vsel %vm68, %v58, 0
    %v156 = vsel %vm68, %v59, 0
    %v159 = vsel %vm68, %v60, 0
    %v162 = vsel %vm68, %v61, 0
    %v165 = vsel %vm68, %v62, 0
    %v168 = vsel %vm68, %v63, 0
    %170 = vmatprep.subr.mxu0 0.0
    %171 = vmatpush1.msra.mxu0 %v142
    %172 = vmatprep.subr.mxu0 0.0
    %173 = vmatpush1.msra.mxu0 %v143
    %174 = vmatprep.subr.mxu0 0.0
    %175 = vmatpush1.msra.mxu0 %v144
    %176 = vmatprep.subr.mxu0 0.0
    %177 = vmatpush1.msra.mxu0 %v145
    %178 = vmatprep.subr.mxu0 0.0
    %179 = vmatpush1.msra.mxu0 0.0
    %180 = vmatprep.subr.mxu0 0.0
    %181 = vmatpush1.msra.mxu0 0.0
    %182 = vmatprep.subr.mxu0 0.0
    %183 = vmatpush1.msra.mxu0 0.0
    %184 = vmatprep.subr.mxu0 0.0
    %185 = vmatpush1.msra.mxu0 0.0
    %186 = vmatprep.subr.mxu0 0.0
    %187 = vmatpush1.msra.mxu0 0.0
    %188 = vmatprep.subr.mxu0 0.0
    %189 = vmatpush1.msra.mxu0 0.0
    %190 = vmatprep.subr.mxu0 0.0
    %191 = vmatpush1.msra.mxu0 0.0
    %192 = vmatprep.subr.mxu0 0.0
    %193 = vmatpush1.msra.mxu0 0.0
    %194 = vmatprep.subr.mxu0 0.0
    %195 = vmatpush1.msra.mxu0 0.0
    %196 = vmatprep.subr.mxu0 0.0
    %197 = vmatpush1.msra.mxu0 0.0
    %198 = vmatprep.subr.mxu0 0.0
    %199 = vmatpush1.msra.mxu0 0.0
    %200 = vmatprep.subr.mxu0 0.0
    %201 = vmatpush1.msra.mxu0 0.0
    %202 = vmatprep.subr.mxu0 0.0
    %203 = vmatpush1.msra.mxu0 0.0
    %204 = vmatprep.subr.mxu0 0.0
    %205 = vmatpush1.msra.mxu0 0.0
    %206 = vmatprep.subr.mxu0 0.0
    %207 = vmatpush1.msra.mxu0 0.0
    %208 = vmatprep.subr.mxu0 0.0
    %209 = vmatpush1.msra.mxu0 0.0
    %210 = vmatprep.subr.mxu0 0.0
    %211 = vmatpush1.msra.mxu0 0.0
    %212 = vmatprep.subr.mxu0 0.0
    %213 = vmatpush1.msra.mxu0 0.0
    %214 = vmatprep.subr.mxu0 0.0
    %215 = vmatpush1.msra.mxu0 0.0
    %216 = vmatprep.subr.mxu0 0.0
    %217 = vmatpush1.msra.mxu0 0.0
    %218 = vmatprep.subr.mxu0 0.0
    %219 = vmatpush1.msra.mxu0 0.0
    %220 = vmatprep.subr.mxu0 0.0
    %221 = vmatpush1.msra.mxu0 0.0
    %222 = vmatprep.subr.mxu0 0.0
    %223 = vmatpush1.msra.mxu0 0.0
    %224 = vmatprep.subr.mxu0 0.0
    %225 = vmatpush1.msra.mxu0 0.0
    %226 = vmatprep.subr.mxu0 0.0
    %227 = vmatpush1.msra.mxu0 0.0
    %228 = vmatprep.subr.mxu0 0.0
    %229 = vmatpush1.msra.mxu0 0.0
    %230 = vmatprep.subr.mxu0 0.0
    %231 = vmatpush1.msra.mxu0 0.0
    %232 = vmatprep.subr.mxu0 0.0
    %233 = vmatpush1.msra.mxu0 0.0
    %234 = vmatprep.mubr.f32.mxu0 0.0
    %235 = vmatmul.mubr.f32.gmra.mrb[0].mxu0 %v147
    %v236 = vpop.f32.mrb[0].mxu0
    %v237 = vadd.f32 0.0, %v236
    %v238 = vpop.f32.mrb[0].mxu0
    %239 = vmatprep.mubr.f32.mxu0 0.0
    %240 = vmatmul.mubr.f32.gmra.mrb[0].mxu0 %v150
    %v241 = vpop.f32.mrb[0].mxu0
    %v242 = vadd.f32 0.0, %v241
    %v243 = vpop.f32.mrb[0].mxu0
    %244 = vmatprep.mubr.f32.mxu0 0.0
    %245 = vmatmul.mubr.f32.gmra.mrb[0].mxu0 %v153
    %v246 = vpop.f32.mrb[0].mxu0
    %v247 = vadd.f32 0.0, %v246
    %v248 = vpop.f32.mrb[0].mxu0
    %249 = vmatprep.mubr.f32.mxu0 0.0
    %250 = vmatmul.mubr.f32.gmra.mrb[0].mxu0 %v156
    %v251 = vpop.f32.mrb[0].mxu0
    %v252 = vadd.f32 0.0, %v251
    %v253 = vpop.f32.mrb[0].mxu0
    %254 = vmatprep.mubr.f32.mxu0 0.0
    %255 = vmatmul.mubr.f32.gmra.mrb[0].mxu0 %v159
    %v256 = vpop.f32.mrb[0].mxu0
    %v257 = vadd.f32 0.0, %v256
    %v258 = vpop.f32.mrb[0].mxu0
    %259 = vmatprep.mubr.f32.mxu0 0.0
    %260 = vmatmul.mubr.f32.gmra.mrb[0].mxu0 %v162
    %v261 = vpop.f32.mrb[0].mxu0
    %v262 = vadd.f32 0.0, %v261
    %v263 = vpop.f32.mrb[0].mxu0
    %264 = vmatprep.mubr.f32.mxu0 0.0
    %265 = vmatmul.mubr.f32.gmra.mrb[0].mxu0 %v165
    %v266 = vpop.f32.mrb[0].mxu0
    %v267 = vadd.f32 0.0, %v266
    %v268 = vpop.f32.mrb[0].mxu0
    %269 = vmatprep.mubr.f32.mxu0 0.0
    %270 = vmatmul.mubr.f32.gmra.mrb[0].mxu0 %v168
    %v271 = vpop.f32.mrb[0].mxu0
    %v272 = vadd.f32 0.0, %v271
    %v273 = vpop.f32.mrb[0].mxu0
    %274 = vdwg.mxu0
    %v276 = vcombine.high %v139, %v139
    %v278 = vunpack.c.l.s4 1966171168
    %v279 = vunpack.c.0.s8 %v278
    %v280 = vlaneseq
    %v281 = vshrl.u32 %v280, 7
    %v282 = vsub.s32 %v279, %v281
    %v283 = vrot.slane %v139, %v282
    %v285 = vunpack.c.l.s4 1966171168
    %v286 = vunpack.c.0.s8 %v285
    %v287 = vlaneseq
    %v288 = vshrl.u32 %v287, 7
    %v289 = vsub.s32 %v286, %v288
    %v290 = vrot.slane %v276, %v289
    %v291 = vcombine.high %v283, %v283
    %v292 = vcombine.high %v290, %v290
    %v294 = vunpack.c.l.s4 1966171168
    %v295 = vunpack.c.0.s8 %v294
    %v296 = vlaneseq
    %v297 = vshrl.u32 %v296, 7
    %v298 = vsub.s32 %v295, %v297
    %v299 = vrot.slane %v283, %v298
    %v301 = vunpack.c.l.s4 1966171168
    %v302 = vunpack.c.0.s8 %v301
    %v303 = vlaneseq
    %v304 = vshrl.u32 %v303, 7
    %v305 = vsub.s32 %v302, %v304
    %v306 = vrot.slane %v290, %v305
    %v308 = vunpack.c.l.s4 1966171168
    %v309 = vunpack.c.0.s8 %v308
    %v310 = vlaneseq
    %v311 = vshrl.u32 %v310, 7
    %v312 = vsub.s32 %v309, %v311
    %v313 = vrot.slane %v291, %v312
    %v315 = vunpack.c.l.s4 1966171168
    %v316 = vunpack.c.0.s8 %v315
    %v317 = vlaneseq
    %v318 = vshrl.u32 %v317, 7
    %v319 = vsub.s32 %v316, %v318
    %v320 = vrot.slane %v292, %v319
    %v321 = vcombine.high %v299, %v299
    %v322 = vcombine.high %v306, %v306
    %v323 = vcombine.high %v313, %v313
    %v324 = vcombine.high %v320, %v320
    %v325 = vlaneseq
    %v326 = vshrl.u32 %v325, 7
    %v327 = vsub.s32 0, %v326
    %v328 = vrot.slane %v299, %v327
    %v329 = vlaneseq
    %v330 = vshrl.u32 %v329, 7
    %v331 = vsub.s32 0, %v330
    %v332 = vrot.slane %v313, %v331
    %v333 = vlaneseq
    %v334 = vshrl.u32 %v333, 7
    %v335 = vsub.s32 0, %v334
    %v336 = vrot.slane %v321, %v335
    %v337 = vlaneseq
    %v338 = vshrl.u32 %v337, 7
    %v339 = vsub.s32 0, %v338
    %v340 = vrot.slane %v323, %v339
    %v341 = vlaneseq
    %v342 = vshrl.u32 %v341, 7
    %v343 = vsub.s32 0, %v342
    %v344 = vrot.slane %v306, %v343
    %v345 = vlaneseq
    %v346 = vshrl.u32 %v345, 7
    %v347 = vsub.s32 0, %v346
    %v348 = vrot.slane %v320, %v347
    %v349 = vlaneseq
    %v350 = vshrl.u32 %v349, 7
    %v351 = vsub.s32 0, %v350
    %v352 = vrot.slane %v322, %v351
    %v353 = vlaneseq
    %v354 = vshrl.u32 %v353, 7
    %v355 = vsub.s32 0, %v354
    %v356 = vrot.slane %v324, %v355
    %v365 = vadd.f32 %v237, %v328
    %v366 = vadd.f32 %v242, %v332
    %v367 = vadd.f32 %v247, %v336
    %v368 = vadd.f32 %v252, %v340
    %v369 = vadd.f32 %v257, %v344
    %v370 = vadd.f32 %v262, %v348
    %v371 = vadd.f32 %v267, %v352
    %v372 = vadd.f32 %v272, %v356
    %v373 = vld [vmem:[%s4] sm:$0x1]
    %v375 = vlaneseq
    %v376 = vshrl.u32 %v375, 7
    %v377 = vsub.s32 0, %v376
    %v378 = vrot.slane %v373, %v377
    %v380 = vadd.f32 %v365, %v378
    %v381 = vadd.f32 %v366, %v378
    %v382 = vadd.f32 %v367, %v378
    %v383 = vadd.f32 %v368, %v378
    %v384 = vadd.f32 %v369, %v378
    %v385 = vadd.f32 %v370, %v378
    %v386 = vadd.f32 %v371, %v378
    %v387 = vadd.f32 %v372, %v378
    %v388 = vmax.f32 %v380, 0.0
    %v389 = vmax.f32 %v381, 0.0
    %v390 = vmax.f32 %v382, 0.0
    %v391 = vmax.f32 %v383, 0.0
    %v392 = vmax.f32 %v384, 0.0
    %v393 = vmax.f32 %v385, 0.0
    %v394 = vmax.f32 %v386, 0.0
    %v395 = vmax.f32 %v387, 0.0
    %v396 = vld [vmem:[%s5] sm:$0xff]
    %v397 = vld [vmem:[%s5 + $0x8] sm:$0xff]
    %v398 = vld [vmem:[%s5 + $0x10] sm:$0xff]
    %v399 = vld [vmem:[%s5 + $0x18] sm:$0xff]
    %v401 = vsel %vm68, %v388, 0
    %v404 = vsel %vm68, %v389, 0
    %v407 = vsel %vm68, %v390, 0
    %v410 = vsel %vm68, %v391, 0
    %v413 = vsel %vm68, %v392, 0
    %v416 = vsel %vm68, %v393, 0
    %v419 = vsel %vm68, %v394, 0
    %v422 = vsel %vm68, %v395, 0
    %424 = vmatprep.subr.mxu0 0.0
    %425 = vmatpush1.msra.mxu0 %v396
    %426 = vmatprep.subr.mxu0 0.0
    %427 = vmatpush1.msra.mxu0 %v397
    %428 = vmatprep.subr.mxu0 0.0
    %429 = vmatpush1.msra.mxu0 %v398
    %430 = vmatprep.subr.mxu0 0.0
    %431 = vmatpush1.msra.mxu0 %v399
    %432 = vmatprep.subr.mxu0 0.0
    %433 = vmatpush1.msra.mxu0 0.0
    %434 = vmatprep.subr.mxu0 0.0
    %435 = vmatpush1.msra.mxu0 0.0
    %436 = vmatprep.subr.mxu0 0.0
    %437 = vmatpush1.msra.mxu0 0.0
    %438 = vmatprep.subr.mxu0 0.0
    %439 = vmatpush1.msra.mxu0 0.0
    %440 = vmatprep.subr.mxu0 0.0
    %441 = vmatpush1.msra.mxu0 0.0
    %442 = vmatprep.subr.mxu0 0.0
    %443 = vmatpush1.msra.mxu0 0.0
    %444 = vmatprep.subr.mxu0 0.0
    %445 = vmatpush1.msra.mxu0 0.0
    %446 = vmatprep.subr.mxu0 0.0
    %447 = vmatpush1.msra.mxu0 0.0
    %448 = vmatprep.subr.mxu0 0.0
    %449 = vmatpush1.msra.mxu0 0.0
    %450 = vmatprep.subr.mxu0 0.0
    %451 = vmatpush1.msra.mxu0 0.0
    %452 = vmatprep.subr.mxu0 0.0
    %453 = vmatpush1.msra.mxu0 0.0
    %454 = vmatprep.subr.mxu0 0.0
    %455 = vmatpush1.msra.mxu0 0.0
    %456 = vmatprep.subr.mxu0 0.0
    %457 = vmatpush1.msra.mxu0 0.0
    %458 = vmatprep.subr.mxu0 0.0
    %459 = vmatpush1.msra.mxu0 0.0
    %460 = vmatprep.subr.mxu0 0.0
    %461 = vmatpush1.msra.mxu0 0.0
    %462 = vmatprep.subr.mxu0 0.0
    %463 = vmatpush1.msra.mxu0 0.0
    %464 = vmatprep.subr.mxu0 0.0
    %465 = vmatpush1.msra.mxu0 0.0
    %466 = vmatprep.subr.mxu0 0.0
    %467 = vmatpush1.msra.mxu0 0.0
    %468 = vmatprep.subr.mxu0 0.0
    %469 = vmatpush1.msra.mxu0 0.0
    %470 = vmatprep.subr.mxu0 0.0
    %471 = vmatpush1.msra.mxu0 0.0
    %472 = vmatprep.subr.mxu0 0.0
    %473 = vmatpush1.msra.mxu0 0.0
    %474 = vmatprep.subr.mxu0 0.0
    %475 = vmatpush1.msra.mxu0 0.0
    %476 = vmatprep.subr.mxu0 0.0
    %477 = vmatpush1.msra.mxu0 0.0
    %478 = vmatprep.subr.mxu0 0.0
    %479 = vmatpush1.msra.mxu0 0.0
    %480 = vmatprep.subr.mxu0 0.0
    %481 = vmatpush1.msra.mxu0 0.0
    %482 = vmatprep.subr.mxu0 0.0
    %483 = vmatpush1.msra.mxu0 0.0
    %484 = vmatprep.subr.mxu0 0.0
    %485 = vmatpush1.msra.mxu0 0.0
    %486 = vmatprep.subr.mxu0 0.0
    %487 = vmatpush1.msra.mxu0 0.0
    %488 = vmatprep.mubr.f32.mxu0 0.0
    %489 = vmatmul.mubr.f32.gmra.mrb[0].mxu0 %v401
    %v490 = vpop.f32.mrb[0].mxu0
    %v491 = vadd.f32 0.0, %v490
    %v492 = vpop.f32.mrb[0].mxu0
    %493 = vmatprep.mubr.f32.mxu0 0.0
    %494 = vmatmul.mubr.f32.gmra.mrb[0].mxu0 %v404
    %v495 = vpop.f32.mrb[0].mxu0
    %v496 = vadd.f32 0.0, %v495
    %v497 = vpop.f32.mrb[0].mxu0
    %498 = vmatprep.mubr.f32.mxu0 0.0
    %499 = vmatmul.mubr.f32.gmra.mrb[0].mxu0 %v407
    %v500 = vpop.f32.mrb[0].mxu0
    %v501 = vadd.f32 0.0, %v500
    %v502 = vpop.f32.mrb[0].mxu0
    %503 = vmatprep.mubr.f32.mxu0 0.0
    %504 = vmatmul.mubr.f32.gmra.mrb[0].mxu0 %v410
    %v505 = vpop.f32.mrb[0].mxu0
    %v506 = vadd.f32 0.0, %v505
    %v507 = vpop.f32.mrb[0].mxu0
    %508 = vmatprep.mubr.f32.mxu0 0.0
    %509 = vmatmul.mubr.f32.gmra.mrb[0].mxu0 %v413
    %v510 = vpop.f32.mrb[0].mxu0
    %v511 = vadd.f32 0.0, %v510
    %v512 = vpop.f32.mrb[0].mxu0
    %513 = vmatprep.mubr.f32.mxu0 0.0
    %514 = vmatmul.mubr.f32.gmra.mrb[0].mxu0 %v416
    %v515 = vpop.f32.mrb[0].mxu0
    %v516 = vadd.f32 0.0, %v515
    %v517 = vpop.f32.mrb[0].mxu0
    %518 = vmatprep.mubr.f32.mxu0 0.0
    %519 = vmatmul.mubr.f32.gmra.mrb[0].mxu0 %v419
    %v520 = vpop.f32.mrb[0].mxu0
    %v521 = vadd.f32 0.0, %v520
    %v522 = vpop.f32.mrb[0].mxu0
    %523 = vmatprep.mubr.f32.mxu0 0.0
    %524 = vmatmul.mubr.f32.gmra.mrb[0].mxu0 %v422
    %v525 = vpop.f32.mrb[0].mxu0
    %v526 = vadd.f32 0.0, %v525
    %v527 = vpop.f32.mrb[0].mxu0
    %528 = vdwg.mxu0
    %v529 = vld [vmem:[%s6] sm:$0x1]
    %v531 = vlaneseq
    %v532 = vshrl.u32 %v531, 7
    %v533 = vsub.s32 0, %v532
    %v534 = vrot.slane %v529, %v533
    %v536 = vadd.f32 %v491, %v534
    %v537 = vadd.f32 %v496, %v534
    %v538 = vadd.f32 %v501, %v534
    %v539 = vadd.f32 %v506, %v534
    %v540 = vadd.f32 %v511, %v534
    %v541 = vadd.f32 %v516, %v534
    %v542 = vadd.f32 %v521, %v534
    %v543 = vadd.f32 %v526, %v534
    %vm544 = vcmask 15360
    %v545 = vsel %vm544, %v536, -inf
    %v546 = vrot.slane %v545, 4
    %v547 = vmax.f32 %v545, %v546
    %v548 = vrot.slane %v547, 2
    %v549 = vmax.f32 %v547, %v548
    %v550 = vrot.slane %v549, 1
    %v551 = vmax.f32 %v549, %v550
    %v552 = vsel %vm544, %v537, -inf
    %v553 = vrot.slane %v552, 4
    %v554 = vmax.f32 %v552, %v553
    %v555 = vrot.slane %v554, 2
    %v556 = vmax.f32 %v554, %v555
    %v557 = vrot.slane %v556, 1
    %v558 = vmax.f32 %v556, %v557
    %v559 = vsel %vm544, %v538, -inf
    %v560 = vrot.slane %v559, 4
    %v561 = vmax.f32 %v559, %v560
    %v562 = vrot.slane %v561, 2
    %v563 = vmax.f32 %v561, %v562
    %v564 = vrot.slane %v563, 1
    %v565 = vmax.f32 %v563, %v564
    %v566 = vsel %vm544, %v539, -inf
    %v567 = vrot.slane %v566, 4
    %v568 = vmax.f32 %v566, %v567
    %v569 = vrot.slane %v568, 2
    %v570 = vmax.f32 %v568, %v569
    %v571 = vrot.slane %v570, 1
    %v572 = vmax.f32 %v570, %v571
    %v573 = vsel %vm544, %v540, -inf
    %v574 = vrot.slane %v573, 4
    %v575 = vmax.f32 %v573, %v574
    %v576 = vrot.slane %v575, 2
    %v577 = vmax.f32 %v575, %v576
    %v578 = vrot.slane %v577, 1
    %v579 = vmax.f32 %v577, %v578
    %v580 = vsel %vm544, %v541, -inf
    %v581 = vrot.slane %v580, 4
    %v582 = vmax.f32 %v580, %v581
    %v583 = vrot.slane %v582, 2
    %v584 = vmax.f32 %v582, %v583
    %v585 = vrot.slane %v584, 1
    %v586 = vmax.f32 %v584, %v585
    %v587 = vsel %vm544, %v542, -inf
    %v588 = vrot.slane %v587, 4
    %v589 = vmax.f32 %v587, %v588
    %v590 = vrot.slane %v589, 2
    %v591 = vmax.f32 %v589, %v590
    %v592 = vrot.slane %v591, 1
    %v593 = vmax.f32 %v591, %v592
    %v594 = vsel %vm544, %v543, -inf
    %v595 = vrot.slane %v594, 4
    %v596 = vmax.f32 %v594, %v595
    %v597 = vrot.slane %v596, 2
    %v598 = vmax.f32 %v596, %v597
    %v599 = vrot.slane %v598, 1
    %v600 = vmax.f32 %v598, %v599
    %v601 = vsub.f32 %v536, %v551
    %v602 = vsub.f32 %v537, %v558
    %v603 = vsub.f32 %v538, %v565
    %v604 = vsub.f32 %v539, %v572
    %v605 = vsub.f32 %v540, %v579
    %v606 = vsub.f32 %v541, %v586
    %v607 = vsub.f32 %v542, %v593
    %v608 = vsub.f32 %v543, %v600
    %v609 = vmul.f32 %v601, 1.442695
    %v610 = vpow.pop %v609
    %v611 = vmul.f32 %v602, 1.442695
    %v612 = vpow.pop %v611
    %v613 = vmul.f32 %v603, 1.442695
    %v614 = vpow.pop %v613
    %v615 = vmul.f32 %v604, 1.442695
    %v616 = vpow.pop %v615
    %v617 = vmul.f32 %v605, 1.442695
    %v618 = vpow.pop %v617
    %v619 = vmul.f32 %v606, 1.442695
    %v620 = vpow.pop %v619
    %v621 = vmul.f32 %v607, 1.442695
    %v622 = vpow.pop %v621
    %v623 = vmul.f32 %v608, 1.442695
    %v624 = vpow.pop %v623
    %v625 = vsel %vm544, %v610, 0.0
    %v626 = vrot.slane %v625, 4
    %v627 = vadd.f32 %v625, %v626
    %v628 = vrot.slane %v627, 2
    %v629 = vadd.f32 %v627, %v628
    %v630 = vrot.slane %v629, 1
    %v631 = vadd.f32 %v629, %v630
    %v632 = vsel %vm544, %v612, 0.0
    %v633 = vrot.slane %v632, 4
    %v634 = vadd.f32 %v632, %v633
    %v635 = vrot.slane %v634, 2
    %v636 = vadd.f32 %v634, %v635
    %v637 = vrot.slane %v636, 1
    %v638 = vadd.f32 %v636, %v637
    %v639 = vsel %vm544, %v614, 0.0
    %v640 = vrot.slane %v639, 4
    %v641 = vadd.f32 %v639, %v640
    %v642 = vrot.slane %v641, 2
    %v643 = vadd.f32 %v641, %v642
    %v644 = vrot.slane %v643, 1
    %v645 = vadd.f32 %v643, %v644
    %v646 = vsel %vm544, %v616, 0.0
    %v647 = vrot.slane %v646, 4
    %v648 = vadd.f32 %v646, %v647
    %v649 = vrot.slane %v648, 2
    %v650 = vadd.f32 %v648, %v649
    %v651 = vrot.slane %v650, 1
    %v652 = vadd.f32 %v650, %v651
    %v653 = vsel %vm544, %v618, 0.0
    %v654 = vrot.slane %v653, 4
    %v655 = vadd.f32 %v653, %v654
    %v656 = vrot.slane %v655, 2
    %v657 = vadd.f32 %v655, %v656
    %v658 = vrot.slane %v657, 1
    %v659 = vadd.f32 %v657, %v658
    %v660 = vsel %vm544, %v620, 0.0
    %v661 = vrot.slane %v660, 4
    %v662 = vadd.f32 %v660, %v661
    %v663 = vrot.slane %v662, 2
    %v664 = vadd.f32 %v662, %v663
    %v665 = vrot.slane %v664, 1
    %v666 = vadd.f32 %v664, %v665
    %v667 = vsel %vm544, %v622, 0.0
    %v668 = vrot.slane %v667, 4
    %v669 = vadd.f32 %v667, %v668
    %v670 = vrot.slane %v669, 2
    %v671 = vadd.f32 %v669, %v670
    %v672 = vrot.slane %v671, 1
    %v673 = vadd.f32 %v671, %v672
    %v674 = vsel %vm544, %v624, 0.0
    %v675 = vrot.slane %v674, 4
    %v676 = vadd.f32 %v674, %v675
    %v677 = vrot.slane %v676, 2
    %v678 = vadd.f32 %v676, %v677
    %v679 = vrot.slane %v678, 1
    %v680 = vadd.f32 %v678, %v679
    %v681 = vrcp.pop %v631
    %v682 = vmul.f32 %v610, %v681
    %v683 = vrcp.pop %v638
    %v684 = vmul.f32 %v612, %v683
    %v685 = vrcp.pop %v645
    %v686 = vmul.f32 %v614, %v685
    %v687 = vrcp.pop %v652
    %v688 = vmul.f32 %v616, %v687
    %v689 = vrcp.pop %v659
    %v690 = vmul.f32 %v618, %v689
    %v691 = vrcp.pop %v666
    %v692 = vmul.f32 %v620, %v691
    %v693 = vrcp.pop %v673
    %v694 = vmul.f32 %v622, %v693
    %v695 = vrcp.pop %v680
    %v696 = vmul.f32 %v624, %v695
    %697 = vxpose.xlu0.b32.start [1/16] %v682, 128
    %698 = vxpose.xlu0.b32.cont [2/16] 0.0, 128
    %699 = vxpose.xlu0.b32.cont [3/16] 0.0, 128
    %700 = vxpose.xlu0.b32.cont [4/16] 0.0, 128
    %701 = vxpose.xlu0.b32.cont [5/16] 0.0, 128
    %702 = vxpose.xlu0.b32.cont [6/16] 0.0, 128
    %703 = vxpose.xlu0.b32.cont [7/16] 0.0, 128
    %704 = vxpose.xlu0.b32.cont [8/16] 0.0, 128
    %705 = vxpose.xlu0.b32.cont [9/16] 0.0, 128
    %706 = vxpose.xlu0.b32.cont [10/16] 0.0, 128
    %707 = vxpose.xlu0.b32.cont [11/16] 0.0, 128
    %708 = vxpose.xlu0.b32.cont [12/16] 0.0, 128
    %709 = vxpose.xlu0.b32.cont [13/16] 0.0, 128
    %710 = vxpose.xlu0.b32.cont [14/16] 0.0, 128
    %711 = vxpose.xlu0.b32.cont [15/16] 0.0, 128
    %712 = vxpose.xlu0.b32.end [16/16] 0.0, 128
    %v713 = vpop.trf.xlu0
    %v714 = vpop.trf.xlu0
    %v715 = vpop.trf.xlu0
    %v716 = vpop.trf.xlu0
    %v717 = vpop.trf.xlu0
    %v718 = vpop.trf.xlu0
    %v719 = vpop.trf.xlu0
    %v720 = vpop.trf.xlu0
    %v721 = vpop.trf.xlu0
    %v722 = vpop.trf.xlu0
    %v723 = vpop.trf.xlu0
    %v724 = vpop.trf.xlu0
    %v725 = vpop.trf.xlu0
    %v726 = vpop.trf.xlu0
    %v727 = vpop.trf.xlu0
    %v728 = vpop.trf.xlu0
    %vm729 = vcmask 64512
    %v731 = vsel %vm729, %v713, 0
    %733 = vmatprep.subr.mxu0 0.0
    %734 = vmatpush1.msra.mxu0 %v56
    %735 = vmatprep.subr.mxu0 0.0
    %736 = vmatpush1.msra.mxu0 0.0
    %737 = vmatprep.subr.mxu0 0.0
    %738 = vmatpush1.msra.mxu0 0.0
    %739 = vmatprep.subr.mxu0 0.0
    %740 = vmatpush1.msra.mxu0 0.0
    %741 = vmatprep.subr.mxu0 0.0
    %742 = vmatpush1.msra.mxu0 0.0
    %743 = vmatprep.subr.mxu0 0.0
    %744 = vmatpush1.msra.mxu0 0.0
    %745 = vmatprep.subr.mxu0 0.0
    %746 = vmatpush1.msra.mxu0 0.0
    %747 = vmatprep.subr.mxu0 0.0
    %748 = vmatpush1.msra.mxu0 0.0
    %749 = vmatprep.subr.mxu0 0.0
    %750 = vmatpush1.msra.mxu0 0.0
    %751 = vmatprep.subr.mxu0 0.0
    %752 = vmatpush1.msra.mxu0 0.0
    %753 = vmatprep.subr.mxu0 0.0
    %754 = vmatpush1.msra.mxu0 0.0
    %755 = vmatprep.subr.mxu0 0.0
    %756 = vmatpush1.msra.mxu0 0.0
    %757 = vmatprep.subr.mxu0 0.0
    %758 = vmatpush1.msra.mxu0 0.0
    %759 = vmatprep.subr.mxu0 0.0
    %760 = vmatpush1.msra.mxu0 0.0
    %761 = vmatprep.subr.mxu0 0.0
    %762 = vmatpush1.msra.mxu0 0.0
    %763 = vmatprep.subr.mxu0 0.0
    %764 = vmatpush1.msra.mxu0 0.0
    %765 = vmatprep.subr.mxu0 0.0
    %766 = vmatpush1.msra.mxu0 0.0
    %767 = vmatprep.subr.mxu0 0.0
    %768 = vmatpush1.msra.mxu0 0.0
    %769 = vmatprep.subr.mxu0 0.0
    %770 = vmatpush1.msra.mxu0 0.0
    %771 = vmatprep.subr.mxu0 0.0
    %772 = vmatpush1.msra.mxu0 0.0
    %773 = vmatprep.subr.mxu0 0.0
    %774 = vmatpush1.msra.mxu0 0.0
    %775 = vmatprep.subr.mxu0 0.0
    %776 = vmatpush1.msra.mxu0 0.0
    %777 = vmatprep.subr.mxu0 0.0
    %778 = vmatpush1.msra.mxu0 0.0
    %779 = vmatprep.subr.mxu0 0.0
    %780 = vmatpush1.msra.mxu0 0.0
    %781 = vmatprep.subr.mxu0 0.0
    %782 = vmatpush1.msra.mxu0 0.0
    %783 = vmatprep.subr.mxu0 0.0
    %784 = vmatpush1.msra.mxu0 0.0
    %785 = vmatprep.subr.mxu0 0.0
    %786 = vmatpush1.msra.mxu0 0.0
    %787 = vmatprep.subr.mxu0 0.0
    %788 = vmatpush1.msra.mxu0 0.0
    %789 = vmatprep.subr.mxu0 0.0
    %790 = vmatpush1.msra.mxu0 0.0
    %791 = vmatprep.subr.mxu0 0.0
    %792 = vmatpush1.msra.mxu0 0.0
    %793 = vmatprep.subr.mxu0 0.0
    %794 = vmatpush1.msra.mxu0 0.0
    %795 = vmatprep.subr.mxu0 0.0
    %796 = vmatpush1.msra.mxu0 0.0
    %797 = vmatprep.mubr.f32.mxu0 0.0
    %798 = vmatmul.mubr.f32.gmra.mrb[0].mxu0 %v731
    %v799 = vpop.f32.mrb[0].mxu0
    %v800 = vadd.f32 0.0, %v799
    %v801 = vpop.f32.mrb[0].mxu0
    %802 = vdwg.mxu0
    %803 = vxpose.xlu0.b32.start [1/16] %v684, 128
    %804 = vxpose.xlu0.b32.cont [2/16] 0.0, 128
    %805 = vxpose.xlu0.b32.cont [3/16] 0.0, 128
    %806 = vxpose.xlu0.b32.cont [4/16] 0.0, 128
    %807 = vxpose.xlu0.b32.cont [5/16] 0.0, 128
    %808 = vxpose.xlu0.b32.cont [6/16] 0.0, 128
    %809 = vxpose.xlu0.b32.cont [7/16] 0.0, 128
    %810 = vxpose.xlu0.b32.cont [8/16] 0.0, 128
    %811 = vxpose.xlu0.b32.cont [9/16] 0.0, 128
    %812 = vxpose.xlu0.b32.cont [10/16] 0.0, 128
    %813 = vxpose.xlu0.b32.cont [11/16] 0.0, 128
    %814 = vxpose.xlu0.b32.cont [12/16] 0.0, 128
    %815 = vxpose.xlu0.b32.cont [13/16] 0.0, 128
    %816 = vxpose.xlu0.b32.cont [14/16] 0.0, 128
    %817 = vxpose.xlu0.b32.cont [15/16] 0.0, 128
    %818 = vxpose.xlu0.b32.end [16/16] 0.0, 128
    %v819 = vpop.trf.xlu0
    %v820 = vpop.trf.xlu0
    %v821 = vpop.trf.xlu0
    %v822 = vpop.trf.xlu0
    %v823 = vpop.trf.xlu0
    %v824 = vpop.trf.xlu0
    %v825 = vpop.trf.xlu0
    %v826 = vpop.trf.xlu0
    %v827 = vpop.trf.xlu0
    %v828 = vpop.trf.xlu0
    %v829 = vpop.trf.xlu0
    %v830 = vpop.trf.xlu0
    %v831 = vpop.trf.xlu0
    %v832 = vpop.trf.xlu0
    %v833 = vpop.trf.xlu0
    %v834 = vpop.trf.xlu0
    %v836 = vsel %vm729, %v819, 0
    %838 = vmatprep.subr.mxu0 0.0
    %839 = vmatpush1.msra.mxu0 %v57
    %840 = vmatprep.subr.mxu0 0.0
    %841 = vmatpush1.msra.mxu0 0.0
    %842 = vmatprep.subr.mxu0 0.0
    %843 = vmatpush1.msra.mxu0 0.0
    %844 = vmatprep.subr.mxu0 0.0
    %845 = vmatpush1.msra.mxu0 0.0
    %846 = vmatprep.subr.mxu0 0.0
    %847 = vmatpush1.msra.mxu0 0.0
    %848 = vmatprep.subr.mxu0 0.0
    %849 = vmatpush1.msra.mxu0 0.0
    %850 = vmatprep.subr.mxu0 0.0
    %851 = vmatpush1.msra.mxu0 0.0
    %852 = vmatprep.subr.mxu0 0.0
    %853 = vmatpush1.msra.mxu0 0.0
    %854 = vmatprep.subr.mxu0 0.0
    %855 = vmatpush1.msra.mxu0 0.0
    %856 = vmatprep.subr.mxu0 0.0
    %857 = vmatpush1.msra.mxu0 0.0
    %858 = vmatprep.subr.mxu0 0.0
    %859 = vmatpush1.msra.mxu0 0.0
    %860 = vmatprep.subr.mxu0 0.0
    %861 = vmatpush1.msra.mxu0 0.0
    %862 = vmatprep.subr.mxu0 0.0
    %863 = vmatpush1.msra.mxu0 0.0
    %864 = vmatprep.subr.mxu0 0.0
    %865 = vmatpush1.msra.mxu0 0.0
    %866 = vmatprep.subr.mxu0 0.0
    %867 = vmatpush1.msra.mxu0 0.0
    %868 = vmatprep.subr.mxu0 0.0
    %869 = vmatpush1.msra.mxu0 0.0
    %870 = vmatprep.subr.mxu0 0.0
    %871 = vmatpush1.msra.mxu0 0.0
    %872 = vmatprep.subr.mxu0 0.0
    %873 = vmatpush1.msra.mxu0 0.0
    %874 = vmatprep.subr.mxu0 0.0
    %875 = vmatpush1.msra.mxu0 0.0
    %876 = vmatprep.subr.mxu0 0.0
    %877 = vmatpush1.msra.mxu0 0.0
    %878 = vmatprep.subr.mxu0 0.0
    %879 = vmatpush1.msra.mxu0 0.0
    %880 = vmatprep.subr.mxu0 0.0
    %881 = vmatpush1.msra.mxu0 0.0
    %882 = vmatprep.subr.mxu0 0.0
    %883 = vmatpush1.msra.mxu0 0.0
    %884 = vmatprep.subr.mxu0 0.0
    %885 = vmatpush1.msra.mxu0 0.0
    %886 = vmatprep.subr.mxu0 0.0
    %887 = vmatpush1.msra.mxu0 0.0
    %888 = vmatprep.subr.mxu0 0.0
    %889 = vmatpush1.msra.mxu0 0.0
    %890 = vmatprep.subr.mxu0 0.0
    %891 = vmatpush1.msra.mxu0 0.0
    %892 = vmatprep.subr.mxu0 0.0
    %893 = vmatpush1.msra.mxu0 0.0
    %894 = vmatprep.subr.mxu0 0.0
    %895 = vmatpush1.msra.mxu0 0.0
    %896 = vmatprep.subr.mxu0 0.0
    %897 = vmatpush1.msra.mxu0 0.0
    %898 = vmatprep.subr.mxu0 0.0
    %899 = vmatpush1.msra.mxu0 0.0
    %900 = vmatprep.subr.mxu0 0.0
    %901 = vmatpush1.msra.mxu0 0.0
    %902 = vmatprep.mubr.f32.mxu0 0.0
    %903 = vmatmul.mubr.f32.gmra.mrb[0].mxu0 %v836
    %v904 = vpop.f32.mrb[0].mxu0
    %v905 = vadd.f32 0.0, %v904
    %v906 = vpop.f32.mrb[0].mxu0
    %907 = vdwg.mxu0
    %908 = vxpose.xlu0.b32.start [1/16] %v686, 128
    %909 = vxpose.xlu0.b32.cont [2/16] 0.0, 128
    %910 = vxpose.xlu0.b32.cont [3/16] 0.0, 128
    %911 = vxpose.xlu0.b32.cont [4/16] 0.0, 128
    %912 = vxpose.xlu0.b32.cont [5/16] 0.0, 128
    %913 = vxpose.xlu0.b32.cont [6/16] 0.0, 128
    %914 = vxpose.xlu0.b32.cont [7/16] 0.0, 128
    %915 = vxpose.xlu0.b32.cont [8/16] 0.0, 128
    %916 = vxpose.xlu0.b32.cont [9/16] 0.0, 128
    %917 = vxpose.xlu0.b32.cont [10/16] 0.0, 128
    %918 = vxpose.xlu0.b32.cont [11/16] 0.0, 128
    %919 = vxpose.xlu0.b32.cont [12/16] 0.0, 128
    %920 = vxpose.xlu0.b32.cont [13/16] 0.0, 128
    %921 = vxpose.xlu0.b32.cont [14/16] 0.0, 128
    %922 = vxpose.xlu0.b32.cont [15/16] 0.0, 128
    %923 = vxpose.xlu0.b32.end [16/16] 0.0, 128
    %v924 = vpop.trf.xlu0
    %v925 = vpop.trf.xlu0
    %v926 = vpop.trf.xlu0
    %v927 = vpop.trf.xlu0
    %v928 = vpop.trf.xlu0
    %v929 = vpop.trf.xlu0
    %v930 = vpop.trf.xlu0
    %v931 = vpop.trf.xlu0
    %v932 = vpop.trf.xlu0
    %v933 = vpop.trf.xlu0
    %v934 = vpop.trf.xlu0
    %v935 = vpop.trf.xlu0
    %v936 = vpop.trf.xlu0
    %v937 = vpop.trf.xlu0
    %v938 = vpop.trf.xlu0
    %v939 = vpop.trf.xlu0
    %v941 = vsel %vm729, %v924, 0
    %943 = vmatprep.subr.mxu0 0.0
    %944 = vmatpush1.msra.mxu0 %v58
    %945 = vmatprep.subr.mxu0 0.0
    %946 = vmatpush1.msra.mxu0 0.0
    %947 = vmatprep.subr.mxu0 0.0
    %948 = vmatpush1.msra.mxu0 0.0
    %949 = vmatprep.subr.mxu0 0.0
    %950 = vmatpush1.msra.mxu0 0.0
    %951 = vmatprep.subr.mxu0 0.0
    %952 = vmatpush1.msra.mxu0 0.0
    %953 = vmatprep.subr.mxu0 0.0
    %954 = vmatpush1.msra.mxu0 0.0
    %955 = vmatprep.subr.mxu0 0.0
    %956 = vmatpush1.msra.mxu0 0.0
    %957 = vmatprep.subr.mxu0 0.0
    %958 = vmatpush1.msra.mxu0 0.0
    %959 = vmatprep.subr.mxu0 0.0
    %960 = vmatpush1.msra.mxu0 0.0
    %961 = vmatprep.subr.mxu0 0.0
    %962 = vmatpush1.msra.mxu0 0.0
    %963 = vmatprep.subr.mxu0 0.0
    %964 = vmatpush1.msra.mxu0 0.0
    %965 = vmatprep.subr.mxu0 0.0
    %966 = vmatpush1.msra.mxu0 0.0
    %967 = vmatprep.subr.mxu0 0.0
    %968 = vmatpush1.msra.mxu0 0.0
    %969 = vmatprep.subr.mxu0 0.0
    %970 = vmatpush1.msra.mxu0 0.0
    %971 = vmatprep.subr.mxu0 0.0
    %972 = vmatpush1.msra.mxu0 0.0
    %973 = vmatprep.subr.mxu0 0.0
    %974 = vmatpush1.msra.mxu0 0.0
    %975 = vmatprep.subr.mxu0 0.0
    %976 = vmatpush1.msra.mxu0 0.0
    %977 = vmatprep.subr.mxu0 0.0
    %978 = vmatpush1.msra.mxu0 0.0
    %979 = vmatprep.subr.mxu0 0.0
    %980 = vmatpush1.msra.mxu0 0.0
    %981 = vmatprep.subr.mxu0 0.0
    %982 = vmatpush1.msra.mxu0 0.0
    %983 = vmatprep.subr.mxu0 0.0
    %984 = vmatpush1.msra.mxu0 0.0
    %985 = vmatprep.subr.mxu0 0.0
    %986 = vmatpush1.msra.mxu0 0.0
    %987 = vmatprep.subr.mxu0 0.0
    %988 = vmatpush1.msra.mxu0 0.0
    %989 = vmatprep.subr.mxu0 0.0
    %990 = vmatpush1.msra.mxu0 0.0
    %991 = vmatprep.subr.mxu0 0.0
    %992 = vmatpush1.msra.mxu0 0.0
    %993 = vmatprep.subr.mxu0 0.0
    %994 = vmatpush1.msra.mxu0 0.0
    %995 = vmatprep.subr.mxu0 0.0
    %996 = vmatpush1.msra.mxu0 0.0
    %997 = vmatprep.subr.mxu0 0.0
    %998 = vmatpush1.msra.mxu0 0.0
    %999 = vmatprep.subr.mxu0 0.0
    %1000 = vmatpush1.msra.mxu0 0.0
    %1001 = vmatprep.subr.mxu0 0.0
    %1002 = vmatpush1.msra.mxu0 0.0
    %1003 = vmatprep.subr.mxu0 0.0
    %1004 = vmatpush1.msra.mxu0 0.0
    %1005 = vmatprep.subr.mxu0 0.0
    %1006 = vmatpush1.msra.mxu0 0.0
    %1007 = vmatprep.mubr.f32.mxu0 0.0
    %1008 = vmatmul.mubr.f32.gmra.mrb[0].mxu0 %v941
    %v1009 = vpop.f32.mrb[0].mxu0
    %v1010 = vadd.f32 0.0, %v1009
    %v1011 = vpop.f32.mrb[0].mxu0
    %1012 = vdwg.mxu0
    %1013 = vxpose.xlu0.b32.start [1/16] %v688, 128
    %1014 = vxpose.xlu0.b32.cont [2/16] 0.0, 128
    %1015 = vxpose.xlu0.b32.cont [3/16] 0.0, 128
    %1016 = vxpose.xlu0.b32.cont [4/16] 0.0, 128
    %1017 = vxpose.xlu0.b32.cont [5/16] 0.0, 128
    %1018 = vxpose.xlu0.b32.cont [6/16] 0.0, 128
    %1019 = vxpose.xlu0.b32.cont [7/16] 0.0, 128
    %1020 = vxpose.xlu0.b32.cont [8/16] 0.0, 128
    %1021 = vxpose.xlu0.b32.cont [9/16] 0.0, 128
    %1022 = vxpose.xlu0.b32.cont [10/16] 0.0, 128
    %1023 = vxpose.xlu0.b32.cont [11/16] 0.0, 128
    %1024 = vxpose.xlu0.b32.cont [12/16] 0.0, 128
    %1025 = vxpose.xlu0.b32.cont [13/16] 0.0, 128
    %1026 = vxpose.xlu0.b32.cont [14/16] 0.0, 128
    %1027 = vxpose.xlu0.b32.cont [15/16] 0.0, 128
    %1028 = vxpose.xlu0.b32.end [16/16] 0.0, 128
    %v1029 = vpop.trf.xlu0
    %v1030 = vpop.trf.xlu0
    %v1031 = vpop.trf.xlu0
    %v1032 = vpop.trf.xlu0
    %v1033 = vpop.trf.xlu0
    %v1034 = vpop.trf.xlu0
    %v1035 = vpop.trf.xlu0
    %v1036 = vpop.trf.xlu0
    %v1037 = vpop.trf.xlu0
    %v1038 = vpop.trf.xlu0
    %v1039 = vpop.trf.xlu0
    %v1040 = vpop.trf.xlu0
    %v1041 = vpop.trf.xlu0
    %v1042 = vpop.trf.xlu0
    %v1043 = vpop.trf.xlu0
    %v1044 = vpop.trf.xlu0
    %v1046 = vsel %vm729, %v1029, 0
    %1048 = vmatprep.subr.mxu0 0.0
    %1049 = vmatpush1.msra.mxu0 %v59
    %1050 = vmatprep.subr.mxu0 0.0
    %1051 = vmatpush1.msra.mxu0 0.0
    %1052 = vmatprep.subr.mxu0 0.0
    %1053 = vmatpush1.msra.mxu0 0.0
    %1054 = vmatprep.subr.mxu0 0.0
    %1055 = vmatpush1.msra.mxu0 0.0
    %1056 = vmatprep.subr.mxu0 0.0
    %1057 = vmatpush1.msra.mxu0 0.0
    %1058 = vmatprep.subr.mxu0 0.0
    %1059 = vmatpush1.msra.mxu0 0.0
    %1060 = vmatprep.subr.mxu0 0.0
    %1061 = vmatpush1.msra.mxu0 0.0
    %1062 = vmatprep.subr.mxu0 0.0
    %1063 = vmatpush1.msra.mxu0 0.0
    %1064 = vmatprep.subr.mxu0 0.0
    %1065 = vmatpush1.msra.mxu0 0.0
    %1066 = vmatprep.subr.mxu0 0.0
    %1067 = vmatpush1.msra.mxu0 0.0
    %1068 = vmatprep.subr.mxu0 0.0
    %1069 = vmatpush1.msra.mxu0 0.0
    %1070 = vmatprep.subr.mxu0 0.0
    %1071 = vmatpush1.msra.mxu0 0.0
    %1072 = vmatprep.subr.mxu0 0.0
    %1073 = vmatpush1.msra.mxu0 0.0
    %1074 = vmatprep.subr.mxu0 0.0
    %1075 = vmatpush1.msra.mxu0 0.0
    %1076 = vmatprep.subr.mxu0 0.0
    %1077 = vmatpush1.msra.mxu0 0.0
    %1078 = vmatprep.subr.mxu0 0.0
    %1079 = vmatpush1.msra.mxu0 0.0
    %1080 = vmatprep.subr.mxu0 0.0
    %1081 = vmatpush1.msra.mxu0 0.0
    %1082 = vmatprep.subr.mxu0 0.0
    %1083 = vmatpush1.msra.mxu0 0.0
    %1084 = vmatprep.subr.mxu0 0.0
    %1085 = vmatpush1.msra.mxu0 0.0
    %1086 = vmatprep.subr.mxu0 0.0
    %1087 = vmatpush1.msra.mxu0 0.0
    %1088 = vmatprep.subr.mxu0 0.0
    %1089 = vmatpush1.msra.mxu0 0.0
    %1090 = vmatprep.subr.mxu0 0.0
    %1091 = vmatpush1.msra.mxu0 0.0
    %1092 = vmatprep.subr.mxu0 0.0
    %1093 = vmatpush1.msra.mxu0 0.0
    %1094 = vmatprep.subr.mxu0 0.0
    %1095 = vmatpush1.msra.mxu0 0.0
    %1096 = vmatprep.subr.mxu0 0.0
    %1097 = vmatpush1.msra.mxu0 0.0
    %1098 = vmatprep.subr.mxu0 0.0
    %1099 = vmatpush1.msra.mxu0 0.0
    %1100 = vmatprep.subr.mxu0 0.0
    %1101 = vmatpush1.msra.mxu0 0.0
    %1102 = vmatprep.subr.mxu0 0.0
    %1103 = vmatpush1.msra.mxu0 0.0
    %1104 = vmatprep.subr.mxu0 0.0
    %1105 = vmatpush1.msra.mxu0 0.0
    %1106 = vmatprep.subr.mxu0 0.0
    %1107 = vmatpush1.msra.mxu0 0.0
    %1108 = vmatprep.subr.mxu0 0.0
    %1109 = vmatpush1.msra.mxu0 0.0
    %1110 = vmatprep.subr.mxu0 0.0
    %1111 = vmatpush1.msra.mxu0 0.0
    %1112 = vmatprep.mubr.f32.mxu0 0.0
    %1113 = vmatmul.mubr.f32.gmra.mrb[0].mxu0 %v1046
    %v1114 = vpop.f32.mrb[0].mxu0
    %v1115 = vadd.f32 0.0, %v1114
    %v1116 = vpop.f32.mrb[0].mxu0
    %1117 = vdwg.mxu0
    %1118 = vxpose.xlu0.b32.start [1/16] %v690, 128
    %1119 = vxpose.xlu0.b32.cont [2/16] 0.0, 128
    %1120 = vxpose.xlu0.b32.cont [3/16] 0.0, 128
    %1121 = vxpose.xlu0.b32.cont [4/16] 0.0, 128
    %1122 = vxpose.xlu0.b32.cont [5/16] 0.0, 128
    %1123 = vxpose.xlu0.b32.cont [6/16] 0.0, 128
    %1124 = vxpose.xlu0.b32.cont [7/16] 0.0, 128
    %1125 = vxpose.xlu0.b32.cont [8/16] 0.0, 128
    %1126 = vxpose.xlu0.b32.cont [9/16] 0.0, 128
    %1127 = vxpose.xlu0.b32.cont [10/16] 0.0, 128
    %1128 = vxpose.xlu0.b32.cont [11/16] 0.0, 128
    %1129 = vxpose.xlu0.b32.cont [12/16] 0.0, 128
    %1130 = vxpose.xlu0.b32.cont [13/16] 0.0, 128
    %1131 = vxpose.xlu0.b32.cont [14/16] 0.0, 128
    %1132 = vxpose.xlu0.b32.cont [15/16] 0.0, 128
    %1133 = vxpose.xlu0.b32.end [16/16] 0.0, 128
    %v1134 = vpop.trf.xlu0
    %v1135 = vpop.trf.xlu0
    %v1136 = vpop.trf.xlu0
    %v1137 = vpop.trf.xlu0
    %v1138 = vpop.trf.xlu0
    %v1139 = vpop.trf.xlu0
    %v1140 = vpop.trf.xlu0
    %v1141 = vpop.trf.xlu0
    %v1142 = vpop.trf.xlu0
    %v1143 = vpop.trf.xlu0
    %v1144 = vpop.trf.xlu0
    %v1145 = vpop.trf.xlu0
    %v1146 = vpop.trf.xlu0
    %v1147 = vpop.trf.xlu0
    %v1148 = vpop.trf.xlu0
    %v1149 = vpop.trf.xlu0
    %v1151 = vsel %vm729, %v1134, 0
    %1153 = vmatprep.subr.mxu0 0.0
    %1154 = vmatpush1.msra.mxu0 %v60
    %1155 = vmatprep.subr.mxu0 0.0
    %1156 = vmatpush1.msra.mxu0 0.0
    %1157 = vmatprep.subr.mxu0 0.0
    %1158 = vmatpush1.msra.mxu0 0.0
    %1159 = vmatprep.subr.mxu0 0.0
    %1160 = vmatpush1.msra.mxu0 0.0
    %1161 = vmatprep.subr.mxu0 0.0
    %1162 = vmatpush1.msra.mxu0 0.0
    %1163 = vmatprep.subr.mxu0 0.0
    %1164 = vmatpush1.msra.mxu0 0.0
    %1165 = vmatprep.subr.mxu0 0.0
    %1166 = vmatpush1.msra.mxu0 0.0
    %1167 = vmatprep.subr.mxu0 0.0
    %1168 = vmatpush1.msra.mxu0 0.0
    %1169 = vmatprep.subr.mxu0 0.0
    %1170 = vmatpush1.msra.mxu0 0.0
    %1171 = vmatprep.subr.mxu0 0.0
    %1172 = vmatpush1.msra.mxu0 0.0
    %1173 = vmatprep.subr.mxu0 0.0
    %1174 = vmatpush1.msra.mxu0 0.0
    %1175 = vmatprep.subr.mxu0 0.0
    %1176 = vmatpush1.msra.mxu0 0.0
    %1177 = vmatprep.subr.mxu0 0.0
    %1178 = vmatpush1.msra.mxu0 0.0
    %1179 = vmatprep.subr.mxu0 0.0
    %1180 = vmatpush1.msra.mxu0 0.0
    %1181 = vmatprep.subr.mxu0 0.0
    %1182 = vmatpush1.msra.mxu0 0.0
    %1183 = vmatprep.subr.mxu0 0.0
    %1184 = vmatpush1.msra.mxu0 0.0
    %1185 = vmatprep.subr.mxu0 0.0
    %1186 = vmatpush1.msra.mxu0 0.0
    %1187 = vmatprep.subr.mxu0 0.0
    %1188 = vmatpush1.msra.mxu0 0.0
    %1189 = vmatprep.subr.mxu0 0.0
    %1190 = vmatpush1.msra.mxu0 0.0
    %1191 = vmatprep.subr.mxu0 0.0
    %1192 = vmatpush1.msra.mxu0 0.0
    %1193 = vmatprep.subr.mxu0 0.0
    %1194 = vmatpush1.msra.mxu0 0.0
    %1195 = vmatprep.subr.mxu0 0.0
    %1196 = vmatpush1.msra.mxu0 0.0
    %1197 = vmatprep.subr.mxu0 0.0
    %1198 = vmatpush1.msra.mxu0 0.0
    %1199 = vmatprep.subr.mxu0 0.0
    %1200 = vmatpush1.msra.mxu0 0.0
    %1201 = vmatprep.subr.mxu0 0.0
    %1202 = vmatpush1.msra.mxu0 0.0
    %1203 = vmatprep.subr.mxu0 0.0
    %1204 = vmatpush1.msra.mxu0 0.0
    %1205 = vmatprep.subr.mxu0 0.0
    %1206 = vmatpush1.msra.mxu0 0.0
    %1207 = vmatprep.subr.mxu0 0.0
    %1208 = vmatpush1.msra.mxu0 0.0
    %1209 = vmatprep.subr.mxu0 0.0
    %1210 = vmatpush1.msra.mxu0 0.0
    %1211 = vmatprep.subr.mxu0 0.0
    %1212 = vmatpush1.msra.mxu0 0.0
    %1213 = vmatprep.subr.mxu0 0.0
    %1214 = vmatpush1.msra.mxu0 0.0
    %1215 = vmatprep.subr.mxu0 0.0
    %1216 = vmatpush1.msra.mxu0 0.0
    %1217 = vmatprep.mubr.f32.mxu0 0.0
    %1218 = vmatmul.mubr.f32.gmra.mrb[0].mxu0 %v1151
    %v1219 = vpop.f32.mrb[0].mxu0
    %v1220 = vadd.f32 0.0, %v1219
    %v1221 = vpop.f32.mrb[0].mxu0
    %1222 = vdwg.mxu0
    %1223 = vxpose.xlu0.b32.start [1/16] %v692, 128
    %1224 = vxpose.xlu0.b32.cont [2/16] 0.0, 128
    %1225 = vxpose.xlu0.b32.cont [3/16] 0.0, 128
    %1226 = vxpose.xlu0.b32.cont [4/16] 0.0, 128
    %1227 = vxpose.xlu0.b32.cont [5/16] 0.0, 128
    %1228 = vxpose.xlu0.b32.cont [6/16] 0.0, 128
    %1229 = vxpose.xlu0.b32.cont [7/16] 0.0, 128
    %1230 = vxpose.xlu0.b32.cont [8/16] 0.0, 128
    %1231 = vxpose.xlu0.b32.cont [9/16] 0.0, 128
    %1232 = vxpose.xlu0.b32.cont [10/16] 0.0, 128
    %1233 = vxpose.xlu0.b32.cont [11/16] 0.0, 128
    %1234 = vxpose.xlu0.b32.cont [12/16] 0.0, 128
    %1235 = vxpose.xlu0.b32.cont [13/16] 0.0, 128
    %1236 = vxpose.xlu0.b32.cont [14/16] 0.0, 128
    %1237 = vxpose.xlu0.b32.cont [15/16] 0.0, 128
    %1238 = vxpose.xlu0.b32.end [16/16] 0.0, 128
    %v1239 = vpop.trf.xlu0
    %v1240 = vpop.trf.xlu0
    %v1241 = vpop.trf.xlu0
    %v1242 = vpop.trf.xlu0
    %v1243 = vpop.trf.xlu0
    %v1244 = vpop.trf.xlu0
    %v1245 = vpop.trf.xlu0
    %v1246 = vpop.trf.xlu0
    %v1247 = vpop.trf.xlu0
    %v1248 = vpop.trf.xlu0
    %v1249 = vpop.trf.xlu0
    %v1250 = vpop.trf.xlu0
    %v1251 = vpop.trf.xlu0
    %v1252 = vpop.trf.xlu0
    %v1253 = vpop.trf.xlu0
    %v1254 = vpop.trf.xlu0
    %v1256 = vsel %vm729, %v1239, 0
    %1258 = vmatprep.subr.mxu0 0.0
    %1259 = vmatpush1.msra.mxu0 %v61
    %1260 = vmatprep.subr.mxu0 0.0
    %1261 = vmatpush1.msra.mxu0 0.0
    %1262 = vmatprep.subr.mxu0 0.0
    %1263 = vmatpush1.msra.mxu0 0.0
    %1264 = vmatprep.subr.mxu0 0.0
    %1265 = vmatpush1.msra.mxu0 0.0
    %1266 = vmatprep.subr.mxu0 0.0
    %1267 = vmatpush1.msra.mxu0 0.0
    %1268 = vmatprep.subr.mxu0 0.0
    %1269 = vmatpush1.msra.mxu0 0.0
    %1270 = vmatprep.subr.mxu0 0.0
    %1271 = vmatpush1.msra.mxu0 0.0
    %1272 = vmatprep.subr.mxu0 0.0
    %1273 = vmatpush1.msra.mxu0 0.0
    %1274 = vmatprep.subr.mxu0 0.0
    %1275 = vmatpush1.msra.mxu0 0.0
    %1276 = vmatprep.subr.mxu0 0.0
    %1277 = vmatpush1.msra.mxu0 0.0
    %1278 = vmatprep.subr.mxu0 0.0
    %1279 = vmatpush1.msra.mxu0 0.0
    %1280 = vmatprep.subr.mxu0 0.0
    %1281 = vmatpush1.msra.mxu0 0.0
    %1282 = vmatprep.subr.mxu0 0.0
    %1283 = vmatpush1.msra.mxu0 0.0
    %1284 = vmatprep.subr.mxu0 0.0
    %1285 = vmatpush1.msra.mxu0 0.0
    %1286 = vmatprep.subr.mxu0 0.0
    %1287 = vmatpush1.msra.mxu0 0.0
    %1288 = vmatprep.subr.mxu0 0.0
    %1289 = vmatpush1.msra.mxu0 0.0
    %1290 = vmatprep.subr.mxu0 0.0
    %1291 = vmatpush1.msra.mxu0 0.0
    %1292 = vmatprep.subr.mxu0 0.0
    %1293 = vmatpush1.msra.mxu0 0.0
    %1294 = vmatprep.subr.mxu0 0.0
    %1295 = vmatpush1.msra.mxu0 0.0
    %1296 = vmatprep.subr.mxu0 0.0
    %1297 = vmatpush1.msra.mxu0 0.0
    %1298 = vmatprep.subr.mxu0 0.0
    %1299 = vmatpush1.msra.mxu0 0.0
    %1300 = vmatprep.subr.mxu0 0.0
    %1301 = vmatpush1.msra.mxu0 0.0
    %1302 = vmatprep.subr.mxu0 0.0
    %1303 = vmatpush1.msra.mxu0 0.0
    %1304 = vmatprep.subr.mxu0 0.0
    %1305 = vmatpush1.msra.mxu0 0.0
    %1306 = vmatprep.subr.mxu0 0.0
    %1307 = vmatpush1.msra.mxu0 0.0
    %1308 = vmatprep.subr.mxu0 0.0
    %1309 = vmatpush1.msra.mxu0 0.0
    %1310 = vmatprep.subr.mxu0 0.0
    %1311 = vmatpush1.msra.mxu0 0.0
    %1312 = vmatprep.subr.mxu0 0.0
    %1313 = vmatpush1.msra.mxu0 0.0
    %1314 = vmatprep.subr.mxu0 0.0
    %1315 = vmatpush1.msra.mxu0 0.0
    %1316 = vmatprep.subr.mxu0 0.0
    %1317 = vmatpush1.msra.mxu0 0.0
    %1318 = vmatprep.subr.mxu0 0.0
    %1319 = vmatpush1.msra.mxu0 0.0
    %1320 = vmatprep.subr.mxu0 0.0
    %1321 = vmatpush1.msra.mxu0 0.0
    %1322 = vmatprep.mubr.f32.mxu0 0.0
    %1323 = vmatmul.mubr.f32.gmra.mrb[0].mxu0 %v1256
    %v1324 = vpop.f32.mrb[0].mxu0
    %v1325 = vadd.f32 0.0, %v1324
    %v1326 = vpop.f32.mrb[0].mxu0
    %1327 = vdwg.mxu0
    %1328 = vxpose.xlu0.b32.start [1/16] %v694, 128
    %1329 = vxpose.xlu0.b32.cont [2/16] 0.0, 128
    %1330 = vxpose.xlu0.b32.cont [3/16] 0.0, 128
    %1331 = vxpose.xlu0.b32.cont [4/16] 0.0, 128
    %1332 = vxpose.xlu0.b32.cont [5/16] 0.0, 128
    %1333 = vxpose.xlu0.b32.cont [6/16] 0.0, 128
    %1334 = vxpose.xlu0.b32.cont [7/16] 0.0, 128
    %1335 = vxpose.xlu0.b32.cont [8/16] 0.0, 128
    %1336 = vxpose.xlu0.b32.cont [9/16] 0.0, 128
    %1337 = vxpose.xlu0.b32.cont [10/16] 0.0, 128
    %1338 = vxpose.xlu0.b32.cont [11/16] 0.0, 128
    %1339 = vxpose.xlu0.b32.cont [12/16] 0.0, 128
    %1340 = vxpose.xlu0.b32.cont [13/16] 0.0, 128
    %1341 = vxpose.xlu0.b32.cont [14/16] 0.0, 128
    %1342 = vxpose.xlu0.b32.cont [15/16] 0.0, 128
    %1343 = vxpose.xlu0.b32.end [16/16] 0.0, 128
    %v1344 = vpop.trf.xlu0
    %v1345 = vpop.trf.xlu0
    %v1346 = vpop.trf.xlu0
    %v1347 = vpop.trf.xlu0
    %v1348 = vpop.trf.xlu0
    %v1349 = vpop.trf.xlu0
    %v1350 = vpop.trf.xlu0
    %v1351 = vpop.trf.xlu0
    %v1352 = vpop.trf.xlu0
    %v1353 = vpop.trf.xlu0
    %v1354 = vpop.trf.xlu0
    %v1355 = vpop.trf.xlu0
    %v1356 = vpop.trf.xlu0
    %v1357 = vpop.trf.xlu0
    %v1358 = vpop.trf.xlu0
    %v1359 = vpop.trf.xlu0
    %v1361 = vsel %vm729, %v1344, 0
    %1363 = vmatprep.subr.mxu0 0.0
    %1364 = vmatpush1.msra.mxu0 %v62
    %1365 = vmatprep.subr.mxu0 0.0
    %1366 = vmatpush1.msra.mxu0 0.0
    %1367 = vmatprep.subr.mxu0 0.0
    %1368 = vmatpush1.msra.mxu0 0.0
    %1369 = vmatprep.subr.mxu0 0.0
    %1370 = vmatpush1.msra.mxu0 0.0
    %1371 = vmatprep.subr.mxu0 0.0
    %1372 = vmatpush1.msra.mxu0 0.0
    %1373 = vmatprep.subr.mxu0 0.0
    %1374 = vmatpush1.msra.mxu0 0.0
    %1375 = vmatprep.subr.mxu0 0.0
    %1376 = vmatpush1.msra.mxu0 0.0
    %1377 = vmatprep.subr.mxu0 0.0
    %1378 = vmatpush1.msra.mxu0 0.0
    %1379 = vmatprep.subr.mxu0 0.0
    %1380 = vmatpush1.msra.mxu0 0.0
    %1381 = vmatprep.subr.mxu0 0.0
    %1382 = vmatpush1.msra.mxu0 0.0
    %1383 = vmatprep.subr.mxu0 0.0
    %1384 = vmatpush1.msra.mxu0 0.0
    %1385 = vmatprep.subr.mxu0 0.0
    %1386 = vmatpush1.msra.mxu0 0.0
    %1387 = vmatprep.subr.mxu0 0.0
    %1388 = vmatpush1.msra.mxu0 0.0
    %1389 = vmatprep.subr.mxu0 0.0
    %1390 = vmatpush1.msra.mxu0 0.0
    %1391 = vmatprep.subr.mxu0 0.0
    %1392 = vmatpush1.msra.mxu0 0.0
    %1393 = vmatprep.subr.mxu0 0.0
    %1394 = vmatpush1.msra.mxu0 0.0
    %1395 = vmatprep.subr.mxu0 0.0
    %1396 = vmatpush1.msra.mxu0 0.0
    %1397 = vmatprep.subr.mxu0 0.0
    %1398 = vmatpush1.msra.mxu0 0.0
    %1399 = vmatprep.subr.mxu0 0.0
    %1400 = vmatpush1.msra.mxu0 0.0
    %1401 = vmatprep.subr.mxu0 0.0
    %1402 = vmatpush1.msra.mxu0 0.0
    %1403 = vmatprep.subr.mxu0 0.0
    %1404 = vmatpush1.msra.mxu0 0.0
    %1405 = vmatprep.subr.mxu0 0.0
    %1406 = vmatpush1.msra.mxu0 0.0
    %1407 = vmatprep.subr.mxu0 0.0
    %1408 = vmatpush1.msra.mxu0 0.0
    %1409 = vmatprep.subr.mxu0 0.0
    %1410 = vmatpush1.msra.mxu0 0.0
    %1411 = vmatprep.subr.mxu0 0.0
    %1412 = vmatpush1.msra.mxu0 0.0
    %1413 = vmatprep.subr.mxu0 0.0
    %1414 = vmatpush1.msra.mxu0 0.0
    %1415 = vmatprep.subr.mxu0 0.0
    %1416 = vmatpush1.msra.mxu0 0.0
    %1417 = vmatprep.subr.mxu0 0.0
    %1418 = vmatpush1.msra.mxu0 0.0
    %1419 = vmatprep.subr.mxu0 0.0
    %1420 = vmatpush1.msra.mxu0 0.0
    %1421 = vmatprep.subr.mxu0 0.0
    %1422 = vmatpush1.msra.mxu0 0.0
    %1423 = vmatprep.subr.mxu0 0.0
    %1424 = vmatpush1.msra.mxu0 0.0
    %1425 = vmatprep.subr.mxu0 0.0
    %1426 = vmatpush1.msra.mxu0 0.0
    %1427 = vmatprep.mubr.f32.mxu0 0.0
    %1428 = vmatmul.mubr.f32.gmra.mrb[0].mxu0 %v1361
    %v1429 = vpop.f32.mrb[0].mxu0
    %v1430 = vadd.f32 0.0, %v1429
    %v1431 = vpop.f32.mrb[0].mxu0
    %1432 = vdwg.mxu0
    %1433 = vxpose.xlu0.b32.start [1/16] %v696, 128
    %1434 = vxpose.xlu0.b32.cont [2/16] 0.0, 128
    %1435 = vxpose.xlu0.b32.cont [3/16] 0.0, 128
    %1436 = vxpose.xlu0.b32.cont [4/16] 0.0, 128
    %1437 = vxpose.xlu0.b32.cont [5/16] 0.0, 128
    %1438 = vxpose.xlu0.b32.cont [6/16] 0.0, 128
    %1439 = vxpose.xlu0.b32.cont [7/16] 0.0, 128
    %1440 = vxpose.xlu0.b32.cont [8/16] 0.0, 128
    %1441 = vxpose.xlu0.b32.cont [9/16] 0.0, 128
    %1442 = vxpose.xlu0.b32.cont [10/16] 0.0, 128
    %1443 = vxpose.xlu0.b32.cont [11/16] 0.0, 128
    %1444 = vxpose.xlu0.b32.cont [12/16] 0.0, 128
    %1445 = vxpose.xlu0.b32.cont [13/16] 0.0, 128
    %1446 = vxpose.xlu0.b32.cont [14/16] 0.0, 128
    %1447 = vxpose.xlu0.b32.cont [15/16] 0.0, 128
    %1448 = vxpose.xlu0.b32.end [16/16] 0.0, 128
    %v1449 = vpop.trf.xlu0
    %v1450 = vpop.trf.xlu0
    %v1451 = vpop.trf.xlu0
    %v1452 = vpop.trf.xlu0
    %v1453 = vpop.trf.xlu0
    %v1454 = vpop.trf.xlu0
    %v1455 = vpop.trf.xlu0
    %v1456 = vpop.trf.xlu0
    %v1457 = vpop.trf.xlu0
    %v1458 = vpop.trf.xlu0
    %v1459 = vpop.trf.xlu0
    %v1460 = vpop.trf.xlu0
    %v1461 = vpop.trf.xlu0
    %v1462 = vpop.trf.xlu0
    %v1463 = vpop.trf.xlu0
    %v1464 = vpop.trf.xlu0
    %v1466 = vsel %vm729, %v1449, 0
    %1468 = vmatprep.subr.mxu0 0.0
    %1469 = vmatpush1.msra.mxu0 %v63
    %1470 = vmatprep.subr.mxu0 0.0
    %1471 = vmatpush1.msra.mxu0 0.0
    %1472 = vmatprep.subr.mxu0 0.0
    %1473 = vmatpush1.msra.mxu0 0.0
    %1474 = vmatprep.subr.mxu0 0.0
    %1475 = vmatpush1.msra.mxu0 0.0
    %1476 = vmatprep.subr.mxu0 0.0
    %1477 = vmatpush1.msra.mxu0 0.0
    %1478 = vmatprep.subr.mxu0 0.0
    %1479 = vmatpush1.msra.mxu0 0.0
    %1480 = vmatprep.subr.mxu0 0.0
    %1481 = vmatpush1.msra.mxu0 0.0
    %1482 = vmatprep.subr.mxu0 0.0
    %1483 = vmatpush1.msra.mxu0 0.0
    %1484 = vmatprep.subr.mxu0 0.0
    %1485 = vmatpush1.msra.mxu0 0.0
    %1486 = vmatprep.subr.mxu0 0.0
    %1487 = vmatpush1.msra.mxu0 0.0
    %1488 = vmatprep.subr.mxu0 0.0
    %1489 = vmatpush1.msra.mxu0 0.0
    %1490 = vmatprep.subr.mxu0 0.0
    %1491 = vmatpush1.msra.mxu0 0.0
    %1492 = vmatprep.subr.mxu0 0.0
    %1493 = vmatpush1.msra.mxu0 0.0
    %1494 = vmatprep.subr.mxu0 0.0
    %1495 = vmatpush1.msra.mxu0 0.0
    %1496 = vmatprep.subr.mxu0 0.0
    %1497 = vmatpush1.msra.mxu0 0.0
    %1498 = vmatprep.subr.mxu0 0.0
    %1499 = vmatpush1.msra.mxu0 0.0
    %1500 = vmatprep.subr.mxu0 0.0
    %1501 = vmatpush1.msra.mxu0 0.0
    %1502 = vmatprep.subr.mxu0 0.0
    %1503 = vmatpush1.msra.mxu0 0.0
    %1504 = vmatprep.subr.mxu0 0.0
    %1505 = vmatpush1.msra.mxu0 0.0
    %1506 = vmatprep.subr.mxu0 0.0
    %1507 = vmatpush1.msra.mxu0 0.0
    %1508 = vmatprep.subr.mxu0 0.0
    %1509 = vmatpush1.msra.mxu0 0.0
    %1510 = vmatprep.subr.mxu0 0.0
    %1511 = vmatpush1.msra.mxu0 0.0
    %1512 = vmatprep.subr.mxu0 0.0
    %1513 = vmatpush1.msra.mxu0 0.0
    %1514 = vmatprep.subr.mxu0 0.0
    %1515 = vmatpush1.msra.mxu0 0.0
    %1516 = vmatprep.subr.mxu0 0.0
    %1517 = vmatpush1.msra.mxu0 0.0
    %1518 = vmatprep.subr.mxu0 0.0
    %1519 = vmatpush1.msra.mxu0 0.0
    %1520 = vmatprep.subr.mxu0 0.0
    %1521 = vmatpush1.msra.mxu0 0.0
    %1522 = vmatprep.subr.mxu0 0.0
    %1523 = vmatpush1.msra.mxu0 0.0
    %1524 = vmatprep.subr.mxu0 0.0
    %1525 = vmatpush1.msra.mxu0 0.0
    %1526 = vmatprep.subr.mxu0 0.0
    %1527 = vmatpush1.msra.mxu0 0.0
    %1528 = vmatprep.subr.mxu0 0.0
    %1529 = vmatpush1.msra.mxu0 0.0
    %1530 = vmatprep.subr.mxu0 0.0
    %1531 = vmatpush1.msra.mxu0 0.0
    %1532 = vmatprep.mubr.f32.mxu0 0.0
    %1533 = vmatmul.mubr.f32.gmra.mrb[0].mxu0 %v1466
    %v1534 = vpop.f32.mrb[0].mxu0
    %v1535 = vadd.f32 0.0, %v1534
    %v1536 = vpop.f32.mrb[0].mxu0
    %1537 = vdwg.mxu0
    %v1546 = vrot.slane %v905, 7
    %vm1547 = vcmask 1041409
    %v1548 = vsel %vm1547, %v1546, %v800
    %v1549 = vrot.slane %v1010, 6
    %vm1550 = vcmask 1042434
    %v1551 = vsel %vm1550, %v1549, %v1548
    %v1552 = vrot.slane %v1115, 5
    %vm1553 = vcmask 1043459
    %v1554 = vsel %vm1553, %v1552, %v1551
    %v1555 = vrot.slane %v1220, 4
    %vm1556 = vcmask 1044484
    %v1557 = vsel %vm1556, %v1555, %v1554
    %v1558 = vrot.slane %v1325, 3
    %vm1559 = vcmask 1045509
    %v1560 = vsel %vm1559, %v1558, %v1557
    %v1561 = vrot.slane %v1430, 2
    %vm1562 = vcmask 1046534
    %v1563 = vsel %vm1562, %v1561, %v1560
    %v1564 = vrot.slane %v1535, 1
    %vm1565 = vcmask 1047559
    %v1566 = vsel %vm1565, %v1564, %v1563
    %1568 = vst.msk [vmem:[#allocation7] sm:$0xff] %vm68, %v1566
    %v1569 = vsel %vm1550, %v1546, %v800
    %v1570 = vsel %vm1553, %v1549, %v1569
    %v1571 = vsel %vm1556, %v1552, %v1570
    %v1572 = vsel %vm1559, %v1555, %v1571
    %v1573 = vsel %vm1562, %v1558, %v1572
    %v1574 = vsel %vm1565, %v1561, %v1573
    %1575 = vrot.lane.b32.xlu0 %v1574, 32
    %v1576 = vpop.permute.xlu0 %1575
    %1577 = vrot.lane.b32.xlu0 %v1564, 32
    %v1578 = vpop.permute.xlu0 %1577
    %vm1581 = vcmask 523521
    %1582 = vst.msk [vmem:[#allocation7 - $0x1] sm:$0xfe] %vm1581, %v1576
    %vm1583 = vcmask 516352
    %1584 = vst.msk [vmem:[#allocation7 + $0x7] sm:$0x1] %vm1583, %v1578
    // Predicated region
    $region38: #{tpu_custom_call.1} parent=1 // pred_check
      _
    $region39: #{tpu_custom_call.1} parent=1 // pred_check_branch
      %1586 = sbr.rel (0) target = $region41
    $region40: #{tpu_custom_call.1} parent=1 // pred_region
      %s1588 = ssub.s32 128, 128
      %1589 = vsyncadd [#allocation4], %s1588
      %s1591 = sshll.u32 [#allocation7], 4
      %s1592 = int_to_ptr.vmem [resolvable:$true] %s1591
      %1594 = dma.vmem_to_hbm [thread:$0]  %s1592, 128, %s7, [#allocation4]
    $region41: #{tpu_custom_call.1} parent=1 // pred_fallthru
      _
    // Predicated region
    $region42: #{tpu_custom_call.1} parent=1 // pred_check
      _
    $region43: #{tpu_custom_call.1} parent=1 // pred_check_branch
      %1596 = sbr.rel (0) target = $region45
    $region44: #{tpu_custom_call.1} parent=1 // pred_region
      %1597 = dma.done [#allocation4], 128
    $region45: #{tpu_custom_call.1} parent=1 // pred_fallthru
      _
    %1598 = vsyncpa [#allocation3], 1
    %1599 = vsyncpa [#allocation6], 1
    %1600 = vsyncpa [#allocation4], 1

</llo_original>
